<compile_context>
chip_gen: v6e
topology: v6e:2x2x1
jax: 0.10.0
libtpu: 0.0.40
codegen_flags: <defaults>
</compile_context>

<pallas_src>
import jax
import jax.numpy as jnp
from jax.experimental import pallas as pl
from jax.experimental.pallas import tpu as pltpu

# Small stand-in for the 512x512 input, chosen so the tiling scheme is the
# same as at scale: rows on sublanes, lane-dense width, several row blocks.
H, W, C_IN = 32, 128, 3
BR = 8                                   # rows per grid step (full sublane tile)
assert H % BR == 0 and W % 128 == 0
NB = H // BR                             # number of row blocks
H_PAD = H + BR                           # 1 zero halo row on top, zero tail block
C_MODAL = 3                              # synthetic modality channels
C_FUSED = C_IN + C_MODAL
N_CLS = 2                                # anomaly head classes (softmax dim)

_MEAN = (0.485, 0.456, 0.406)            # TF.normalize constants (folded)
_STD = (0.229, 0.224, 0.225)


def _mmf_kernel(x1_ref, x2_ref, kdiff_ref, kdet_ref, bias_ref,
                map_ref, det_ref, win_ref):
    b = pl.program_id(0)

    # ---- assemble halo'd row window: original rows [b*BR-1, b*BR+BR+1) ------
    # x1 block = padded rows [b*BR, b*BR+BR); x2 block = next BR rows (only its
    # first 2 rows are needed).  Zero halo rows handle the vertical boundaries.
    win_ref[:, 0:BR, :] = x1_ref[...]
    win_ref[:, BR:BR + 2, :] = x2_ref[:, 0:2, :]

    # ---- hoisted horizontal boundary masks ----------------------------------
    col = jax.lax.broadcasted_iota(jnp.int32, (BR + 2, W), 1)
    mask_l = col >= 1            # valid lanes when reading column j-1 (dx=-1)
    mask_r = col <= W - 2        # valid lanes when reading column j+1 (dx=+1)

    # ---- folded 3x3 taps: diff logit + detection pre-pool map ---------------
    # All weights (modal conv x heads, /256, ImageNet norm) are pre-folded into
    # two 27-tap kernels; tap weights are SMEM scalars (scalar-splat FMAs).
    acc_diff = jnp.zeros((BR, W), jnp.float32)
    acc_det = jnp.zeros((BR, W), jnp.float32)
    for c in range(C_IN):
        win = win_ref[c]                                       # (BR+2, W)
        src = [
            jnp.where(mask_l, pltpu.roll(win, 1, axis=1), 0.0),      # dx = -1
            win,                                                      # dx =  0
            jnp.where(mask_r, pltpu.roll(win, W - 1, axis=1), 0.0),  # dx = +1
        ]
        for ky in range(3):                 # dy = ky - 1 -> window rows [ky, ky+BR)
            for kx in range(3):
                tap = ky * 3 + kx           # PyTorch (c, ky, kx) tap order
                op = src[kx][ky:ky + BR, :]
                acc_diff = acc_diff + kdiff_ref[c, tap] * op
                acc_det = acc_det + kdet_ref[c, tap] * op

    # ---- anomaly map: softmax(.,dim=1)[:,1] == sigmoid(l1-l0) ---------------
    z = acc_diff + bias_ref[0, 0]
    map_ref[...] = 0.5 * (jnp.tanh(0.5 * z) + 1.0)

    # ---- detection: global average pool + bias + sigmoid --------------------
    @pl.when(b == 0)
    def _init():
        det_ref[...] = jnp.zeros_like(det_ref)

    det_ref[...] += jnp.sum(acc_det, axis=0, keepdims=True)    # (1, W) partial

    @pl.when(b == pl.num_programs(0) - 1)
    def _finalize():
        total = jnp.sum(det_ref[...], axis=1, keepdims=True)   # (1, 1)
        logit = total * (1.0 / (H * W)) + bias_ref[1, 0]
        prob = 0.5 * (jnp.tanh(0.5 * logit) + 1.0)
        det_ref[...] = jnp.broadcast_to(prob, (1, W))


def _fold_params(params):
    """Fold /256, ImageNet norm, modal 3x3 conv and 1x1 heads into two 27-tap
    kernels acting directly on the raw pixel values (stand-in only)."""
    mean = jnp.asarray(_MEAN, jnp.float32)
    std = jnp.asarray(_STD, jnp.float32)
    w_modal = params["w_modal"].astype(jnp.float32)            # (C_MODAL, C_IN, 3, 3)
    w_anom = params["w_anom"].astype(jnp.float32)              # (N_CLS, C_FUSED)
    b_anom = params["b_anom"].astype(jnp.float32)              # (N_CLS, 1)
    w_det = params["w_det"].astype(jnp.float32)                # (1, C_FUSED)
    b_det = params["b_det"].astype(jnp.float32)                # (1, 1)

    dw = w_anom[1] - w_anom[0]          # 2-class softmax -> sigmoid(l1 - l0)
    wd = w_det[0]

    k_diff = jnp.einsum("m,mcyx->cyx", dw[C_IN:], w_modal) / 256.0
    k_diff = k_diff.at[:, 1, 1].add(dw[:C_IN] / (256.0 * std))
    k_det = jnp.einsum("m,mcyx->cyx", wd[C_IN:], w_modal) / 256.0
    k_det = k_det.at[:, 1, 1].add(wd[:C_IN] / (256.0 * std))

    b_diff = (b_anom[1, 0] - b_anom[0, 0]) - jnp.sum(dw[:C_IN] * mean / std)
    b_dett = b_det[0, 0] - jnp.sum(wd[:C_IN] * mean / std)
    bias = jnp.stack([b_diff, b_dett]).reshape(2, 1)

    return k_diff.reshape(C_IN, 9), k_det.reshape(C_IN, 9), bias


@jax.jit
def mmf_forward(x_hwc, params):
    k_diff, k_det, bias = _fold_params(params)

    # layout plumbing: HWC -> (C, H, W), rows on sublanes, W on lanes,
    # 1 zero halo row on top + a zero tail block for the (b+1) halo view.
    x_chw = jnp.transpose(x_hwc, (2, 0, 1)).astype(jnp.float32)
    x_pad = jnp.zeros((C_IN, H_PAD, W), jnp.float32).at[:, 1:H + 1, :].set(x_chw)

    prob_map, det_row = pl.pallas_call(
        _mmf_kernel,
        grid=(NB,),
        in_specs=[
            pl.BlockSpec((C_IN, BR, W), lambda b: (0, b, 0)),        # current rows
            pl.BlockSpec((C_IN, BR, W), lambda b: (0, b + 1, 0)),    # bottom halo
            pl.BlockSpec(memory_space=pltpu.MemorySpace.SMEM),       # k_diff taps
            pl.BlockSpec(memory_space=pltpu.MemorySpace.SMEM),       # k_det taps
            pl.BlockSpec(memory_space=pltpu.MemorySpace.SMEM),       # biases
        ],
        out_specs=[
            pl.BlockSpec((BR, W), lambda b: (b, 0)),                 # anomaly map
            pl.BlockSpec((1, W), lambda b: (0, 0)),                  # detection acc
        ],
        out_shape=[
            jax.ShapeDtypeStruct((H, W), jnp.float32),
            jax.ShapeDtypeStruct((1, W), jnp.float32),
        ],
        scratch_shapes=[pltpu.VMEM((C_IN, BR + 2, W), jnp.float32)],
        compiler_params=pltpu.CompilerParams(
            dimension_semantics=("arbitrary",)),
    )(x_pad, x_pad, k_diff, k_det, bias)

    return prob_map, det_row[0, 0]


if __name__ == "__main__":
    key = jax.random.PRNGKey(0)
    kimg, k1, k2, k3, k4, k5 = jax.random.split(key, 6)

    # deterministic synthetic parameters (stand-ins for the external networks)
    params = {
        "w_modal": jax.random.normal(k1, (C_MODAL, C_IN, 3, 3), jnp.float32) * 0.1,
        "w_anom": jax.random.normal(k2, (N_CLS, C_FUSED), jnp.float32) * 0.1,
        "b_anom": jax.random.normal(k3, (N_CLS, 1), jnp.float32) * 0.1,
        "w_det": jax.random.normal(k4, (1, C_FUSED), jnp.float32) * 0.1,
        "b_det": jax.random.normal(k5, (1, 1), jnp.float32) * 0.1,
    }

    # raw uint8-style image, HWC, values in [0, 255)
    x_hwc = jax.random.uniform(kimg, (H, W, C_IN), jnp.float32, 0.0, 255.0)

    anomaly_map, prob = mmf_forward(x_hwc, params)
    jax.block_until_ready((anomaly_map, prob))

    probability = float(prob)
    label = 1 if probability > 0.5 else 0

    assert anomaly_map.shape == (H, W)
    assert float(jnp.min(anomaly_map)) >= 0.0 and float(jnp.max(anomaly_map)) <= 1.0
    assert 0.0 <= probability <= 1.0
    assert label in (0, 1)
    print("KERNEL_OK")
</pallas_src>

<mosaic_0001>
module attributes {stable_mosaic.version = 11 : i64} {
  func.func @_mmf_kernel(%arg0: i32, %arg1: memref<3x8x128xf32, #tpu.memory_space<vmem>>, %arg2: memref<3x8x128xf32, #tpu.memory_space<vmem>>, %arg3: memref<3x9xf32, #tpu.memory_space<smem>>, %arg4: memref<3x9xf32, #tpu.memory_space<smem>>, %arg5: memref<2x1xf32, #tpu.memory_space<smem>>, %arg6: memref<8x128xf32, #tpu.memory_space<vmem>>, %arg7: memref<1x128xf32, #tpu.memory_space<vmem>>, %arg8: memref<3x10x128xf32, #tpu.memory_space<vmem>>) attributes {dimension_semantics = [#tpu.dimension_semantics<arbitrary>], iteration_bounds = array<i64: 4>, scalar_prefetch = 0 : i64, scratch_operands = 1 : i64, tpu.core_type = #tpu.core_type<tc>, window_params = [{transform_indices = @transform_0, window_bounds = array<i64: 3, 8, 128>}, {transform_indices = @transform_1, window_bounds = array<i64: 3, 8, 128>}, {transform_indices = @transform_2, window_bounds = array<i64: 3, 9>}, {transform_indices = @transform_3, window_bounds = array<i64: 3, 9>}, {transform_indices = @transform_4, window_bounds = array<i64: 2, 1>}, {transform_indices = @transform_5, window_bounds = array<i64: 8, 128>}, {pipeline_mode = #tpu.pipeline_mode<synchronous>, transform_indices = @transform_6, window_bounds = array<i64: 1, 128>}]} {
    %c0 = arith.constant 0 : index
    %c0_0 = arith.constant 0 : index
    %c0_1 = arith.constant 0 : index
    %0 = vector.load %arg1[%c0, %c0_0, %c0_1] : memref<3x8x128xf32, #tpu.memory_space<vmem>>, vector<3x8x128xf32>
    %c0_2 = arith.constant 0 : index
    %c0_3 = arith.constant 0 : index
    %c0_4 = arith.constant 0 : index
    %1 = vector.load %arg8[%c0_2, %c0_3, %c0_4] : memref<3x10x128xf32, #tpu.memory_space<vmem>>, vector<3x8x128xf32>
    tpu.vector_store %arg8[%c0_2, %c0_3, %c0_4], %0 {strides = array<i32>} : memref<3x10x128xf32, #tpu.memory_space<vmem>>, vector<3x8x128xf32>,
    %c0_5 = arith.constant 0 : index
    %c0_6 = arith.constant 0 : index
    %c0_7 = arith.constant 0 : index
    %2 = vector.load %arg2[%c0_5, %c0_6, %c0_7] : memref<3x8x128xf32, #tpu.memory_space<vmem>>, vector<3x2x128xf32>
    %c0_8 = arith.constant 0 : index
    %c8 = arith.constant 8 : index
    %c0_9 = arith.constant 0 : index
    %3 = vector.load %arg8[%c0_8, %c8, %c0_9] : memref<3x10x128xf32, #tpu.memory_space<vmem>>, vector<3x2x128xf32>
    tpu.vector_store %arg8[%c0_8, %c8, %c0_9], %2 {strides = array<i32>} : memref<3x10x128xf32, #tpu.memory_space<vmem>>, vector<3x2x128xf32>,
    %4 = tpu.iota {dimensions = array<i32: 1>} : vector<10x128xi32>
    %c1_i32 = arith.constant 1 : i32
    %5 = vector.broadcast %c1_i32 : i32 to vector<10x128xi32>
    %6 = arith.cmpi sge, %4, %5 : vector<10x128xi32>
    %c126_i32 = arith.constant 126 : i32
    %7 = vector.broadcast %c126_i32 : i32 to vector<10x128xi32>
    %8 = arith.cmpi sle, %4, %7 : vector<10x128xi32>
    %cst = arith.constant 0.000000e+00 : f32
    %9 = vector.broadcast %cst : f32 to vector<8x128xf32>
    %cst_10 = arith.constant 0.000000e+00 : f32
    %10 = vector.broadcast %cst_10 : f32 to vector<8x128xf32>
    %c0_11 = arith.constant 0 : index
    %c0_12 = arith.constant 0 : index
    %c0_13 = arith.constant 0 : index
    %11 = vector.load %arg8[%c0_11, %c0_12, %c0_13] : memref<3x10x128xf32, #tpu.memory_space<vmem>>, vector<1x10x128xf32>
    %12 = vector.shape_cast %11 : vector<1x10x128xf32> to vector<10x128xf32>
    %c1_i32_14 = arith.constant 1 : i32
    %13 = tpu.dynamic_rotate %12 by %c1_i32_14 dim 1 : vector<10x128xf32>, i32 -> vector<10x128xf32>
    %cst_15 = arith.constant 0.000000e+00 : f32
    %14 = vector.broadcast %cst_15 : f32 to vector<10x128xf32>
    %15 = arith.select %6, %13, %14 : vector<10x128xi1>, vector<10x128xf32>
    %c127_i32 = arith.constant 127 : i32
    %16 = tpu.dynamic_rotate %12 by %c127_i32 dim 1 : vector<10x128xf32>, i32 -> vector<10x128xf32>
    %cst_16 = arith.constant 0.000000e+00 : f32
    %17 = vector.broadcast %cst_16 : f32 to vector<10x128xf32>
    %18 = arith.select %8, %16, %17 : vector<10x128xi1>, vector<10x128xf32>
    %19 = vector.extract_strided_slice %15 {offsets = [0, 0], sizes = [8, 128], strides = [1, 1]} : vector<10x128xf32> to vector<8x128xf32>
    %c0_17 = arith.constant 0 : index
    %c0_18 = arith.constant 0 : index
    %20 = memref.load %arg3[%c0_17, %c0_18] : memref<3x9xf32, #tpu.memory_space<smem>>
    %21 = vector.broadcast %20 : f32 to vector<8x128xf32>
    %22 = arith.mulf %21, %19 : vector<8x128xf32>
    %23 = arith.addf %9, %22 : vector<8x128xf32>
    %c0_19 = arith.constant 0 : index
    %c0_20 = arith.constant 0 : index
    %24 = memref.load %arg4[%c0_19, %c0_20] : memref<3x9xf32, #tpu.memory_space<smem>>
    %25 = vector.broadcast %24 : f32 to vector<8x128xf32>
    %26 = arith.mulf %25, %19 : vector<8x128xf32>
    %27 = arith.addf %10, %26 : vector<8x128xf32>
    %28 = vector.extract_strided_slice %12 {offsets = [0, 0], sizes = [8, 128], strides = [1, 1]} : vector<10x128xf32> to vector<8x128xf32>
    %c0_21 = arith.constant 0 : index
    %c1 = arith.constant 1 : index
    %29 = memref.load %arg3[%c0_21, %c1] : memref<3x9xf32, #tpu.memory_space<smem>>
    %30 = vector.broadcast %29 : f32 to vector<8x128xf32>
    %31 = arith.mulf %30, %28 : vector<8x128xf32>
    %32 = arith.addf %23, %31 : vector<8x128xf32>
    %c0_22 = arith.constant 0 : index
    %c1_23 = arith.constant 1 : index
    %33 = memref.load %arg4[%c0_22, %c1_23] : memref<3x9xf32, #tpu.memory_space<smem>>
    %34 = vector.broadcast %33 : f32 to vector<8x128xf32>
    %35 = arith.mulf %34, %28 : vector<8x128xf32>
    %36 = arith.addf %27, %35 : vector<8x128xf32>
    %37 = vector.extract_strided_slice %18 {offsets = [0, 0], sizes = [8, 128], strides = [1, 1]} : vector<10x128xf32> to vector<8x128xf32>
    %c0_24 = arith.constant 0 : index
    %c2 = arith.constant 2 : index
    %38 = memref.load %arg3[%c0_24, %c2] : memref<3x9xf32, #tpu.memory_space<smem>>
    %39 = vector.broadcast %38 : f32 to vector<8x128xf32>
    %40 = arith.mulf %39, %37 : vector<8x128xf32>
    %41 = arith.addf %32, %40 : vector<8x128xf32>
    %c0_25 = arith.constant 0 : index
    %c2_26 = arith.constant 2 : index
    %42 = memref.load %arg4[%c0_25, %c2_26] : memref<3x9xf32, #tpu.memory_space<smem>>
    %43 = vector.broadcast %42 : f32 to vector<8x128xf32>
    %44 = arith.mulf %43, %37 : vector<8x128xf32>
    %45 = arith.addf %36, %44 : vector<8x128xf32>
    %46 = vector.extract_strided_slice %15 {offsets = [1, 0], sizes = [8, 128], strides = [1, 1]} : vector<10x128xf32> to vector<8x128xf32>
    %c0_27 = arith.constant 0 : index
    %c3 = arith.constant 3 : index
    %47 = memref.load %arg3[%c0_27, %c3] : memref<3x9xf32, #tpu.memory_space<smem>>
    %48 = vector.broadcast %47 : f32 to vector<8x128xf32>
    %49 = arith.mulf %48, %46 : vector<8x128xf32>
    %50 = arith.addf %41, %49 : vector<8x128xf32>
    %c0_28 = arith.constant 0 : index
    %c3_29 = arith.constant 3 : index
    %51 = memref.load %arg4[%c0_28, %c3_29] : memref<3x9xf32, #tpu.memory_space<smem>>
    %52 = vector.broadcast %51 : f32 to vector<8x128xf32>
    %53 = arith.mulf %52, %46 : vector<8x128xf32>
    %54 = arith.addf %45, %53 : vector<8x128xf32>
    %55 = vector.extract_strided_slice %12 {offsets = [1, 0], sizes = [8, 128], strides = [1, 1]} : vector<10x128xf32> to vector<8x128xf32>
    %c0_30 = arith.constant 0 : index
    %c4 = arith.constant 4 : index
    %56 = memref.load %arg3[%c0_30, %c4] : memref<3x9xf32, #tpu.memory_space<smem>>
    %57 = vector.broadcast %56 : f32 to vector<8x128xf32>
    %58 = arith.mulf %57, %55 : vector<8x128xf32>
    %59 = arith.addf %50, %58 : vector<8x128xf32>
    %c0_31 = arith.constant 0 : index
    %c4_32 = arith.constant 4 : index
    %60 = memref.load %arg4[%c0_31, %c4_32] : memref<3x9xf32, #tpu.memory_space<smem>>
    %61 = vector.broadcast %60 : f32 to vector<8x128xf32>
    %62 = arith.mulf %61, %55 : vector<8x128xf32>
    %63 = arith.addf %54, %62 : vector<8x128xf32>
    %64 = vector.extract_strided_slice %18 {offsets = [1, 0], sizes = [8, 128], strides = [1, 1]} : vector<10x128xf32> to vector<8x128xf32>
    %c0_33 = arith.constant 0 : index
    %c5 = arith.constant 5 : index
    %65 = memref.load %arg3[%c0_33, %c5] : memref<3x9xf32, #tpu.memory_space<smem>>
    %66 = vector.broadcast %65 : f32 to vector<8x128xf32>
    %67 = arith.mulf %66, %64 : vector<8x128xf32>
    %68 = arith.addf %59, %67 : vector<8x128xf32>
    %c0_34 = arith.constant 0 : index
    %c5_35 = arith.constant 5 : index
    %69 = memref.load %arg4[%c0_34, %c5_35] : memref<3x9xf32, #tpu.memory_space<smem>>
    %70 = vector.broadcast %69 : f32 to vector<8x128xf32>
    %71 = arith.mulf %70, %64 : vector<8x128xf32>
    %72 = arith.addf %63, %71 : vector<8x128xf32>
    %73 = vector.extract_strided_slice %15 {offsets = [2, 0], sizes = [8, 128], strides = [1, 1]} : vector<10x128xf32> to vector<8x128xf32>
    %c0_36 = arith.constant 0 : index
    %c6 = arith.constant 6 : index
    %74 = memref.load %arg3[%c0_36, %c6] : memref<3x9xf32, #tpu.memory_space<smem>>
    %75 = vector.broadcast %74 : f32 to vector<8x128xf32>
    %76 = arith.mulf %75, %73 : vector<8x128xf32>
    %77 = arith.addf %68, %76 : vector<8x128xf32>
    %c0_37 = arith.constant 0 : index
    %c6_38 = arith.constant 6 : index
    %78 = memref.load %arg4[%c0_37, %c6_38] : memref<3x9xf32, #tpu.memory_space<smem>>
    %79 = vector.broadcast %78 : f32 to vector<8x128xf32>
    %80 = arith.mulf %79, %73 : vector<8x128xf32>
    %81 = arith.addf %72, %80 : vector<8x128xf32>
    %82 = vector.extract_strided_slice %12 {offsets = [2, 0], sizes = [8, 128], strides = [1, 1]} : vector<10x128xf32> to vector<8x128xf32>
    %c0_39 = arith.constant 0 : index
    %c7 = arith.constant 7 : index
    %83 = memref.load %arg3[%c0_39, %c7] : memref<3x9xf32, #tpu.memory_space<smem>>
    %84 = vector.broadcast %83 : f32 to vector<8x128xf32>
    %85 = arith.mulf %84, %82 : vector<8x128xf32>
    %86 = arith.addf %77, %85 : vector<8x128xf32>
    %c0_40 = arith.constant 0 : index
    %c7_41 = arith.constant 7 : index
    %87 = memref.load %arg4[%c0_40, %c7_41] : memref<3x9xf32, #tpu.memory_space<smem>>
    %88 = vector.broadcast %87 : f32 to vector<8x128xf32>
    %89 = arith.mulf %88, %82 : vector<8x128xf32>
    %90 = arith.addf %81, %89 : vector<8x128xf32>
    %91 = vector.extract_strided_slice %18 {offsets = [2, 0], sizes = [8, 128], strides = [1, 1]} : vector<10x128xf32> to vector<8x128xf32>
    %c0_42 = arith.constant 0 : index
    %c8_43 = arith.constant 8 : index
    %92 = memref.load %arg3[%c0_42, %c8_43] : memref<3x9xf32, #tpu.memory_space<smem>>
    %93 = vector.broadcast %92 : f32 to vector<8x128xf32>
    %94 = arith.mulf %93, %91 : vector<8x128xf32>
    %95 = arith.addf %86, %94 : vector<8x128xf32>
    %c0_44 = arith.constant 0 : index
    %c8_45 = arith.constant 8 : index
    %96 = memref.load %arg4[%c0_44, %c8_45] : memref<3x9xf32, #tpu.memory_space<smem>>
    %97 = vector.broadcast %96 : f32 to vector<8x128xf32>
    %98 = arith.mulf %97, %91 : vector<8x128xf32>
    %99 = arith.addf %90, %98 : vector<8x128xf32>
    %c1_46 = arith.constant 1 : index
    %c0_47 = arith.constant 0 : index
    %c0_48 = arith.constant 0 : index
    %100 = vector.load %arg8[%c1_46, %c0_47, %c0_48] : memref<3x10x128xf32, #tpu.memory_space<vmem>>, vector<1x10x128xf32>
    %101 = vector.shape_cast %100 : vector<1x10x128xf32> to vector<10x128xf32>
    %c1_i32_49 = arith.constant 1 : i32
    %102 = tpu.dynamic_rotate %101 by %c1_i32_49 dim 1 : vector<10x128xf32>, i32 -> vector<10x128xf32>
    %cst_50 = arith.constant 0.000000e+00 : f32
    %103 = vector.broadcast %cst_50 : f32 to vector<10x128xf32>
    %104 = arith.select %6, %102, %103 : vector<10x128xi1>, vector<10x128xf32>
    %c127_i32_51 = arith.constant 127 : i32
    %105 = tpu.dynamic_rotate %101 by %c127_i32_51 dim 1 : vector<10x128xf32>, i32 -> vector<10x128xf32>
    %cst_52 = arith.constant 0.000000e+00 : f32
    %106 = vector.broadcast %cst_52 : f32 to vector<10x128xf32>
    %107 = arith.select %8, %105, %106 : vector<10x128xi1>, vector<10x128xf32>
    %108 = vector.extract_strided_slice %104 {offsets = [0, 0], sizes = [8, 128], strides = [1, 1]} : vector<10x128xf32> to vector<8x128xf32>
    %c1_53 = arith.constant 1 : index
    %c0_54 = arith.constant 0 : index
    %109 = memref.load %arg3[%c1_53, %c0_54] : memref<3x9xf32, #tpu.memory_space<smem>>
    %110 = vector.broadcast %109 : f32 to vector<8x128xf32>
    %111 = arith.mulf %110, %108 : vector<8x128xf32>
    %112 = arith.addf %95, %111 : vector<8x128xf32>
    %c1_55 = arith.constant 1 : index
    %c0_56 = arith.constant 0 : index
    %113 = memref.load %arg4[%c1_55, %c0_56] : memref<3x9xf32, #tpu.memory_space<smem>>
    %114 = vector.broadcast %113 : f32 to vector<8x128xf32>
    %115 = arith.mulf %114, %108 : vector<8x128xf32>
    %116 = arith.addf %99, %115 : vector<8x128xf32>
    %117 = vector.extract_strided_slice %101 {offsets = [0, 0], sizes = [8, 128], strides = [1, 1]} : vector<10x128xf32> to vector<8x128xf32>
    %c1_57 = arith.constant 1 : index
    %c1_58 = arith.constant 1 : index
    %118 = memref.load %arg3[%c1_57, %c1_58] : memref<3x9xf32, #tpu.memory_space<smem>>
    %119 = vector.broadcast %118 : f32 to vector<8x128xf32>
    %120 = arith.mulf %119, %117 : vector<8x128xf32>
    %121 = arith.addf %112, %120 : vector<8x128xf32>
    %c1_59 = arith.constant 1 : index
    %c1_60 = arith.constant 1 : index
    %122 = memref.load %arg4[%c1_59, %c1_60] : memref<3x9xf32, #tpu.memory_space<smem>>
    %123 = vector.broadcast %122 : f32 to vector<8x128xf32>
    %124 = arith.mulf %123, %117 : vector<8x128xf32>
    %125 = arith.addf %116, %124 : vector<8x128xf32>
    %126 = vector.extract_strided_slice %107 {offsets = [0, 0], sizes = [8, 128], strides = [1, 1]} : vector<10x128xf32> to vector<8x128xf32>
    %c1_61 = arith.constant 1 : index
    %c2_62 = arith.constant 2 : index
    %127 = memref.load %arg3[%c1_61, %c2_62] : memref<3x9xf32, #tpu.memory_space<smem>>
    %128 = vector.broadcast %127 : f32 to vector<8x128xf32>
    %129 = arith.mulf %128, %126 : vector<8x128xf32>
    %130 = arith.addf %121, %129 : vector<8x128xf32>
    %c1_63 = arith.constant 1 : index
    %c2_64 = arith.constant 2 : index
    %131 = memref.load %arg4[%c1_63, %c2_64] : memref<3x9xf32, #tpu.memory_space<smem>>
    %132 = vector.broadcast %131 : f32 to vector<8x128xf32>
    %133 = arith.mulf %132, %126 : vector<8x128xf32>
    %134 = arith.addf %125, %133 : vector<8x128xf32>
    %135 = vector.extract_strided_slice %104 {offsets = [1, 0], sizes = [8, 128], strides = [1, 1]} : vector<10x128xf32> to vector<8x128xf32>
    %c1_65 = arith.constant 1 : index
    %c3_66 = arith.constant 3 : index
    %136 = memref.load %arg3[%c1_65, %c3_66] : memref<3x9xf32, #tpu.memory_space<smem>>
    %137 = vector.broadcast %136 : f32 to vector<8x128xf32>
    %138 = arith.mulf %137, %135 : vector<8x128xf32>
    %139 = arith.addf %130, %138 : vector<8x128xf32>
    %c1_67 = arith.constant 1 : index
    %c3_68 = arith.constant 3 : index
    %140 = memref.load %arg4[%c1_67, %c3_68] : memref<3x9xf32, #tpu.memory_space<smem>>
    %141 = vector.broadcast %140 : f32 to vector<8x128xf32>
    %142 = arith.mulf %141, %135 : vector<8x128xf32>
    %143 = arith.addf %134, %142 : vector<8x128xf32>
    %144 = vector.extract_strided_slice %101 {offsets = [1, 0], sizes = [8, 128], strides = [1, 1]} : vector<10x128xf32> to vector<8x128xf32>
    %c1_69 = arith.constant 1 : index
    %c4_70 = arith.constant 4 : index
    %145 = memref.load %arg3[%c1_69, %c4_70] : memref<3x9xf32, #tpu.memory_space<smem>>
    %146 = vector.broadcast %145 : f32 to vector<8x128xf32>
    %147 = arith.mulf %146, %144 : vector<8x128xf32>
    %148 = arith.addf %139, %147 : vector<8x128xf32>
    %c1_71 = arith.constant 1 : index
    %c4_72 = arith.constant 4 : index
    %149 = memref.load %arg4[%c1_71, %c4_72] : memref<3x9xf32, #tpu.memory_space<smem>>
    %150 = vector.broadcast %149 : f32 to vector<8x128xf32>
    %151 = arith.mulf %150, %144 : vector<8x128xf32>
    %152 = arith.addf %143, %151 : vector<8x128xf32>
    %153 = vector.extract_strided_slice %107 {offsets = [1, 0], sizes = [8, 128], strides = [1, 1]} : vector<10x128xf32> to vector<8x128xf32>
    %c1_73 = arith.constant 1 : index
    %c5_74 = arith.constant 5 : index
    %154 = memref.load %arg3[%c1_73, %c5_74] : memref<3x9xf32, #tpu.memory_space<smem>>
    %155 = vector.broadcast %154 : f32 to vector<8x128xf32>
    %156 = arith.mulf %155, %153 : vector<8x128xf32>
    %157 = arith.addf %148, %156 : vector<8x128xf32>
    %c1_75 = arith.constant 1 : index
    %c5_76 = arith.constant 5 : index
    %158 = memref.load %arg4[%c1_75, %c5_76] : memref<3x9xf32, #tpu.memory_space<smem>>
    %159 = vector.broadcast %158 : f32 to vector<8x128xf32>
    %160 = arith.mulf %159, %153 : vector<8x128xf32>
    %161 = arith.addf %152, %160 : vector<8x128xf32>
    %162 = vector.extract_strided_slice %104 {offsets = [2, 0], sizes = [8, 128], strides = [1, 1]} : vector<10x128xf32> to vector<8x128xf32>
    %c1_77 = arith.constant 1 : index
    %c6_78 = arith.constant 6 : index
    %163 = memref.load %arg3[%c1_77, %c6_78] : memref<3x9xf32, #tpu.memory_space<smem>>
    %164 = vector.broadcast %163 : f32 to vector<8x128xf32>
    %165 = arith.mulf %164, %162 : vector<8x128xf32>
    %166 = arith.addf %157, %165 : vector<8x128xf32>
    %c1_79 = arith.constant 1 : index
    %c6_80 = arith.constant 6 : index
    %167 = memref.load %arg4[%c1_79, %c6_80] : memref<3x9xf32, #tpu.memory_space<smem>>
    %168 = vector.broadcast %167 : f32 to vector<8x128xf32>
    %169 = arith.mulf %168, %162 : vector<8x128xf32>
    %170 = arith.addf %161, %169 : vector<8x128xf32>
    %171 = vector.extract_strided_slice %101 {offsets = [2, 0], sizes = [8, 128], strides = [1, 1]} : vector<10x128xf32> to vector<8x128xf32>
    %c1_81 = arith.constant 1 : index
    %c7_82 = arith.constant 7 : index
    %172 = memref.load %arg3[%c1_81, %c7_82] : memref<3x9xf32, #tpu.memory_space<smem>>
    %173 = vector.broadcast %172 : f32 to vector<8x128xf32>
    %174 = arith.mulf %173, %171 : vector<8x128xf32>
    %175 = arith.addf %166, %174 : vector<8x128xf32>
    %c1_83 = arith.constant 1 : index
    %c7_84 = arith.constant 7 : index
    %176 = memref.load %arg4[%c1_83, %c7_84] : memref<3x9xf32, #tpu.memory_space<smem>>
    %177 = vector.broadcast %176 : f32 to vector<8x128xf32>
    %178 = arith.mulf %177, %171 : vector<8x128xf32>
    %179 = arith.addf %170, %178 : vector<8x128xf32>
    %180 = vector.extract_strided_slice %107 {offsets = [2, 0], sizes = [8, 128], strides = [1, 1]} : vector<10x128xf32> to vector<8x128xf32>
    %c1_85 = arith.constant 1 : index
    %c8_86 = arith.constant 8 : index
    %181 = memref.load %arg3[%c1_85, %c8_86] : memref<3x9xf32, #tpu.memory_space<smem>>
    %182 = vector.broadcast %181 : f32 to vector<8x128xf32>
    %183 = arith.mulf %182, %180 : vector<8x128xf32>
    %184 = arith.addf %175, %183 : vector<8x128xf32>
    %c1_87 = arith.constant 1 : index
    %c8_88 = arith.constant 8 : index
    %185 = memref.load %arg4[%c1_87, %c8_88] : memref<3x9xf32, #tpu.memory_space<smem>>
    %186 = vector.broadcast %185 : f32 to vector<8x128xf32>
    %187 = arith.mulf %186, %180 : vector<8x128xf32>
    %188 = arith.addf %179, %187 : vector<8x128xf32>
    %c2_89 = arith.constant 2 : index
    %c0_90 = arith.constant 0 : index
    %c0_91 = arith.constant 0 : index
    %189 = vector.load %arg8[%c2_89, %c0_90, %c0_91] : memref<3x10x128xf32, #tpu.memory_space<vmem>>, vector<1x10x128xf32>
    %190 = vector.shape_cast %189 : vector<1x10x128xf32> to vector<10x128xf32>
    %c1_i32_92 = arith.constant 1 : i32
    %191 = tpu.dynamic_rotate %190 by %c1_i32_92 dim 1 : vector<10x128xf32>, i32 -> vector<10x128xf32>
    %cst_93 = arith.constant 0.000000e+00 : f32
    %192 = vector.broadcast %cst_93 : f32 to vector<10x128xf32>
    %193 = arith.select %6, %191, %192 : vector<10x128xi1>, vector<10x128xf32>
    %c127_i32_94 = arith.constant 127 : i32
    %194 = tpu.dynamic_rotate %190 by %c127_i32_94 dim 1 : vector<10x128xf32>, i32 -> vector<10x128xf32>
    %cst_95 = arith.constant 0.000000e+00 : f32
    %195 = vector.broadcast %cst_95 : f32 to vector<10x128xf32>
    %196 = arith.select %8, %194, %195 : vector<10x128xi1>, vector<10x128xf32>
    %197 = vector.extract_strided_slice %193 {offsets = [0, 0], sizes = [8, 128], strides = [1, 1]} : vector<10x128xf32> to vector<8x128xf32>
    %c2_96 = arith.constant 2 : index
    %c0_97 = arith.constant 0 : index
    %198 = memref.load %arg3[%c2_96, %c0_97] : memref<3x9xf32, #tpu.memory_space<smem>>
    %199 = vector.broadcast %198 : f32 to vector<8x128xf32>
    %200 = arith.mulf %199, %197 : vector<8x128xf32>
    %201 = arith.addf %184, %200 : vector<8x128xf32>
    %c2_98 = arith.constant 2 : index
    %c0_99 = arith.constant 0 : index
    %202 = memref.load %arg4[%c2_98, %c0_99] : memref<3x9xf32, #tpu.memory_space<smem>>
    %203 = vector.broadcast %202 : f32 to vector<8x128xf32>
    %204 = arith.mulf %203, %197 : vector<8x128xf32>
    %205 = arith.addf %188, %204 : vector<8x128xf32>
    %206 = vector.extract_strided_slice %190 {offsets = [0, 0], sizes = [8, 128], strides = [1, 1]} : vector<10x128xf32> to vector<8x128xf32>
    %c2_100 = arith.constant 2 : index
    %c1_101 = arith.constant 1 : index
    %207 = memref.load %arg3[%c2_100, %c1_101] : memref<3x9xf32, #tpu.memory_space<smem>>
    %208 = vector.broadcast %207 : f32 to vector<8x128xf32>
    %209 = arith.mulf %208, %206 : vector<8x128xf32>
    %210 = arith.addf %201, %209 : vector<8x128xf32>
    %c2_102 = arith.constant 2 : index
    %c1_103 = arith.constant 1 : index
    %211 = memref.load %arg4[%c2_102, %c1_103] : memref<3x9xf32, #tpu.memory_space<smem>>
    %212 = vector.broadcast %211 : f32 to vector<8x128xf32>
    %213 = arith.mulf %212, %206 : vector<8x128xf32>
    %214 = arith.addf %205, %213 : vector<8x128xf32>
    %215 = vector.extract_strided_slice %196 {offsets = [0, 0], sizes = [8, 128], strides = [1, 1]} : vector<10x128xf32> to vector<8x128xf32>
    %c2_104 = arith.constant 2 : index
    %c2_105 = arith.constant 2 : index
    %216 = memref.load %arg3[%c2_104, %c2_105] : memref<3x9xf32, #tpu.memory_space<smem>>
    %217 = vector.broadcast %216 : f32 to vector<8x128xf32>
    %218 = arith.mulf %217, %215 : vector<8x128xf32>
    %219 = arith.addf %210, %218 : vector<8x128xf32>
    %c2_106 = arith.constant 2 : index
    %c2_107 = arith.constant 2 : index
    %220 = memref.load %arg4[%c2_106, %c2_107] : memref<3x9xf32, #tpu.memory_space<smem>>
    %221 = vector.broadcast %220 : f32 to vector<8x128xf32>
    %222 = arith.mulf %221, %215 : vector<8x128xf32>
    %223 = arith.addf %214, %222 : vector<8x128xf32>
    %224 = vector.extract_strided_slice %193 {offsets = [1, 0], sizes = [8, 128], strides = [1, 1]} : vector<10x128xf32> to vector<8x128xf32>
    %c2_108 = arith.constant 2 : index
    %c3_109 = arith.constant 3 : index
    %225 = memref.load %arg3[%c2_108, %c3_109] : memref<3x9xf32, #tpu.memory_space<smem>>
    %226 = vector.broadcast %225 : f32 to vector<8x128xf32>
    %227 = arith.mulf %226, %224 : vector<8x128xf32>
    %228 = arith.addf %219, %227 : vector<8x128xf32>
    %c2_110 = arith.constant 2 : index
    %c3_111 = arith.constant 3 : index
    %229 = memref.load %arg4[%c2_110, %c3_111] : memref<3x9xf32, #tpu.memory_space<smem>>
    %230 = vector.broadcast %229 : f32 to vector<8x128xf32>
    %231 = arith.mulf %230, %224 : vector<8x128xf32>
    %232 = arith.addf %223, %231 : vector<8x128xf32>
    %233 = vector.extract_strided_slice %190 {offsets = [1, 0], sizes = [8, 128], strides = [1, 1]} : vector<10x128xf32> to vector<8x128xf32>
    %c2_112 = arith.constant 2 : index
    %c4_113 = arith.constant 4 : index
    %234 = memref.load %arg3[%c2_112, %c4_113] : memref<3x9xf32, #tpu.memory_space<smem>>
    %235 = vector.broadcast %234 : f32 to vector<8x128xf32>
    %236 = arith.mulf %235, %233 : vector<8x128xf32>
    %237 = arith.addf %228, %236 : vector<8x128xf32>
    %c2_114 = arith.constant 2 : index
    %c4_115 = arith.constant 4 : index
    %238 = memref.load %arg4[%c2_114, %c4_115] : memref<3x9xf32, #tpu.memory_space<smem>>
    %239 = vector.broadcast %238 : f32 to vector<8x128xf32>
    %240 = arith.mulf %239, %233 : vector<8x128xf32>
    %241 = arith.addf %232, %240 : vector<8x128xf32>
    %242 = vector.extract_strided_slice %196 {offsets = [1, 0], sizes = [8, 128], strides = [1, 1]} : vector<10x128xf32> to vector<8x128xf32>
    %c2_116 = arith.constant 2 : index
    %c5_117 = arith.constant 5 : index
    %243 = memref.load %arg3[%c2_116, %c5_117] : memref<3x9xf32, #tpu.memory_space<smem>>
    %244 = vector.broadcast %243 : f32 to vector<8x128xf32>
    %245 = arith.mulf %244, %242 : vector<8x128xf32>
    %246 = arith.addf %237, %245 : vector<8x128xf32>
    %c2_118 = arith.constant 2 : index
    %c5_119 = arith.constant 5 : index
    %247 = memref.load %arg4[%c2_118, %c5_119] : memref<3x9xf32, #tpu.memory_space<smem>>
    %248 = vector.broadcast %247 : f32 to vector<8x128xf32>
    %249 = arith.mulf %248, %242 : vector<8x128xf32>
    %250 = arith.addf %241, %249 : vector<8x128xf32>
    %251 = vector.extract_strided_slice %193 {offsets = [2, 0], sizes = [8, 128], strides = [1, 1]} : vector<10x128xf32> to vector<8x128xf32>
    %c2_120 = arith.constant 2 : index
    %c6_121 = arith.constant 6 : index
    %252 = memref.load %arg3[%c2_120, %c6_121] : memref<3x9xf32, #tpu.memory_space<smem>>
    %253 = vector.broadcast %252 : f32 to vector<8x128xf32>
    %254 = arith.mulf %253, %251 : vector<8x128xf32>
    %255 = arith.addf %246, %254 : vector<8x128xf32>
    %c2_122 = arith.constant 2 : index
    %c6_123 = arith.constant 6 : index
    %256 = memref.load %arg4[%c2_122, %c6_123] : memref<3x9xf32, #tpu.memory_space<smem>>
    %257 = vector.broadcast %256 : f32 to vector<8x128xf32>
    %258 = arith.mulf %257, %251 : vector<8x128xf32>
    %259 = arith.addf %250, %258 : vector<8x128xf32>
    %260 = vector.extract_strided_slice %190 {offsets = [2, 0], sizes = [8, 128], strides = [1, 1]} : vector<10x128xf32> to vector<8x128xf32>
    %c2_124 = arith.constant 2 : index
    %c7_125 = arith.constant 7 : index
    %261 = memref.load %arg3[%c2_124, %c7_125] : memref<3x9xf32, #tpu.memory_space<smem>>
    %262 = vector.broadcast %261 : f32 to vector<8x128xf32>
    %263 = arith.mulf %262, %260 : vector<8x128xf32>
    %264 = arith.addf %255, %263 : vector<8x128xf32>
    %c2_126 = arith.constant 2 : index
    %c7_127 = arith.constant 7 : index
    %265 = memref.load %arg4[%c2_126, %c7_127] : memref<3x9xf32, #tpu.memory_space<smem>>
    %266 = vector.broadcast %265 : f32 to vector<8x128xf32>
    %267 = arith.mulf %266, %260 : vector<8x128xf32>
    %268 = arith.addf %259, %267 : vector<8x128xf32>
    %269 = vector.extract_strided_slice %196 {offsets = [2, 0], sizes = [8, 128], strides = [1, 1]} : vector<10x128xf32> to vector<8x128xf32>
    %c2_128 = arith.constant 2 : index
    %c8_129 = arith.constant 8 : index
    %270 = memref.load %arg3[%c2_128, %c8_129] : memref<3x9xf32, #tpu.memory_space<smem>>
    %271 = vector.broadcast %270 : f32 to vector<8x128xf32>
    %272 = arith.mulf %271, %269 : vector<8x128xf32>
    %273 = arith.addf %264, %272 : vector<8x128xf32>
    %c2_130 = arith.constant 2 : index
    %c8_131 = arith.constant 8 : index
    %274 = memref.load %arg4[%c2_130, %c8_131] : memref<3x9xf32, #tpu.memory_space<smem>>
    %275 = vector.broadcast %274 : f32 to vector<8x128xf32>
    %276 = arith.mulf %275, %269 : vector<8x128xf32>
    %277 = arith.addf %268, %276 : vector<8x128xf32>
    %c0_132 = arith.constant 0 : index
    %c0_133 = arith.constant 0 : index
    %278 = memref.load %arg5[%c0_132, %c0_133] : memref<2x1xf32, #tpu.memory_space<smem>>
    %279 = vector.broadcast %278 : f32 to vector<8x128xf32>
    %280 = arith.addf %273, %279 : vector<8x128xf32>
    %cst_134 = arith.constant 5.000000e-01 : f32
    %281 = vector.broadcast %cst_134 : f32 to vector<8x128xf32>
    %282 = arith.mulf %281, %280 : vector<8x128xf32>
    %283 = math.tanh %282 : vector<8x128xf32>
    %cst_135 = arith.constant 1.000000e+00 : f32
    %284 = vector.broadcast %cst_135 : f32 to vector<8x128xf32>
    %285 = arith.addf %283, %284 : vector<8x128xf32>
    %cst_136 = arith.constant 5.000000e-01 : f32
    %286 = vector.broadcast %cst_136 : f32 to vector<8x128xf32>
    %287 = arith.mulf %286, %285 : vector<8x128xf32>
    %c0_137 = arith.constant 0 : index
    %c0_138 = arith.constant 0 : index
    %288 = vector.load %arg6[%c0_137, %c0_138] : memref<8x128xf32, #tpu.memory_space<vmem>>, vector<8x128xf32>
    tpu.vector_store %arg6[%c0_137, %c0_138], %287 {strides = array<i32>} : memref<8x128xf32, #tpu.memory_space<vmem>>, vector<8x128xf32>,
    %c0_i32 = arith.constant 0 : i32
    %289 = arith.cmpi eq, %arg0, %c0_i32 : i32
    %290 = arith.extui %289 : i1 to i32
    %c0_i32_139 = arith.constant 0 : i32
    %291 = arith.cmpi ne, %290, %c0_i32_139 : i32
    scf.if %291 {
      %cst_146 = arith.constant 0.000000e+00 : f32
      %300 = vector.broadcast %cst_146 : f32 to vector<1x128xf32>
      %c0_147 = arith.constant 0 : index
      %c0_148 = arith.constant 0 : index
      %301 = vector.load %arg7[%c0_147, %c0_148] : memref<1x128xf32, #tpu.memory_space<vmem>>, vector<1x128xf32>
      tpu.vector_store %arg7[%c0_147, %c0_148], %300 {strides = array<i32>} : memref<1x128xf32, #tpu.memory_space<vmem>>, vector<1x128xf32>,
    } else {
    }
    %c0_140 = arith.constant 0 : index
    %c0_141 = arith.constant 0 : index
    %292 = vector.load %arg7[%c0_140, %c0_141] : memref<1x128xf32, #tpu.memory_space<vmem>>, vector<1x128xf32>
    %cst_142 = arith.constant dense<0.000000e+00> : vector<128xf32>
    %293 = vector.multi_reduction <add>, %277, %cst_142 [0] : vector<8x128xf32> to vector<128xf32>
    %294 = vector.shape_cast %293 : vector<128xf32> to vector<1x128xf32>
    %295 = arith.addf %292, %294 : vector<1x128xf32>
    %c0_143 = arith.constant 0 : index
    %c0_144 = arith.constant 0 : index
    %296 = vector.load %arg7[%c0_143, %c0_144] : memref<1x128xf32, #tpu.memory_space<vmem>>, vector<1x128xf32>
    tpu.vector_store %arg7[%c0_143, %c0_144], %295 {strides = array<i32>} : memref<1x128xf32, #tpu.memory_space<vmem>>, vector<1x128xf32>,
    %c3_i32 = arith.constant 3 : i32
    %297 = arith.cmpi eq, %arg0, %c3_i32 : i32
    %298 = arith.extui %297 : i1 to i32
    %c0_i32_145 = arith.constant 0 : i32
    %299 = arith.cmpi ne, %298, %c0_i32_145 : i32
    scf.if %299 {
      %c0_146 = arith.constant 0 : index
      %c0_147 = arith.constant 0 : index
      %300 = vector.load %arg7[%c0_146, %c0_147] : memref<1x128xf32, #tpu.memory_space<vmem>>, vector<1x128xf32>
      %cst_148 = arith.constant dense<0.000000e+00> : vector<1xf32>
      %301 = vector.multi_reduction <add>, %300, %cst_148 [1] : vector<1x128xf32> to vector<1xf32>
      %302 = vector.shape_cast %301 : vector<1xf32> to vector<1x1xf32>
      %cst_149 = arith.constant 2.44140625E-4 : f32
      %303 = vector.broadcast %cst_149 : f32 to vector<1x1xf32>
      %304 = arith.mulf %302, %303 : vector<1x1xf32>
      %c1_150 = arith.constant 1 : index
      %c0_151 = arith.constant 0 : index
      %305 = memref.load %arg5[%c1_150, %c0_151] : memref<2x1xf32, #tpu.memory_space<smem>>
      %306 = vector.broadcast %305 : f32 to vector<1x1xf32>
      %307 = arith.addf %304, %306 : vector<1x1xf32>
      %cst_152 = arith.constant 5.000000e-01 : f32
      %308 = vector.broadcast %cst_152 : f32 to vector<1x1xf32>
      %309 = arith.mulf %308, %307 : vector<1x1xf32>
      %310 = math.tanh %309 : vector<1x1xf32>
      %cst_153 = arith.constant 1.000000e+00 : f32
      %311 = vector.broadcast %cst_153 : f32 to vector<1x1xf32>
      %312 = arith.addf %310, %311 : vector<1x1xf32>
      %cst_154 = arith.constant 5.000000e-01 : f32
      %313 = vector.broadcast %cst_154 : f32 to vector<1x1xf32>
      %314 = arith.mulf %313, %312 : vector<1x1xf32>
      %315 = vector.shape_cast %314 : vector<1x1xf32> to vector<1x1xf32>
      %316 = vector.broadcast %315 : vector<1x1xf32> to vector<1x128xf32>
      %c0_155 = arith.constant 0 : index
      %c0_156 = arith.constant 0 : index
      %317 = vector.load %arg7[%c0_155, %c0_156] : memref<1x128xf32, #tpu.memory_space<vmem>>, vector<1x128xf32>
      tpu.vector_store %arg7[%c0_155, %c0_156], %316 {strides = array<i32>} : memref<1x128xf32, #tpu.memory_space<vmem>>, vector<1x128xf32>,
    } else {
    }
    return
  }
  func.func @transform_0(%arg0: i32) -> (i32, i32, i32) {
    %c0_i32 = arith.constant 0 : i32
    %c0_i32_0 = arith.constant 0 : i32
    %c0_i32_1 = arith.constant 0 : i32
    return %c0_i32, %arg0, %c0_i32_0 : i32, i32, i32
  }
  func.func @transform_1(%arg0: i32) -> (i32, i32, i32) {
    %c1_i32 = arith.constant 1 : i32
    %0 = arith.addi %arg0, %c1_i32 : i32
    %c0_i32 = arith.constant 0 : i32
    %c0_i32_0 = arith.constant 0 : i32
    %c0_i32_1 = arith.constant 0 : i32
    return %c0_i32, %0, %c0_i32_0 : i32, i32, i32
  }
  func.func @transform_2(%arg0: i32) -> (i32, i32) {
    %c0_i32 = arith.constant 0 : i32
    %c0_i32_0 = arith.constant 0 : i32
    %c0_i32_1 = arith.constant 0 : i32
    return %c0_i32, %c0_i32_0 : i32, i32
  }
  func.func @transform_3(%arg0: i32) -> (i32, i32) {
    %c0_i32 = arith.constant 0 : i32
    %c0_i32_0 = arith.constant 0 : i32
    %c0_i32_1 = arith.constant 0 : i32
    return %c0_i32, %c0_i32_0 : i32, i32
  }
  func.func @transform_4(%arg0: i32) -> (i32, i32) {
    %c0_i32 = arith.constant 0 : i32
    %c0_i32_0 = arith.constant 0 : i32
    %c0_i32_1 = arith.constant 0 : i32
    return %c0_i32, %c0_i32_0 : i32, i32
  }
  func.func @transform_5(%arg0: i32) -> (i32, i32) {
    %c0_i32 = arith.constant 0 : i32
    %c0_i32_0 = arith.constant 0 : i32
    return %arg0, %c0_i32 : i32, i32
  }
  func.func @transform_6(%arg0: i32) -> (i32, i32) {
    %c0_i32 = arith.constant 0 : i32
    %c0_i32_0 = arith.constant 0 : i32
    %c0_i32_1 = arith.constant 0 : i32
    return %c0_i32, %c0_i32_0 : i32, i32
  }
}

</mosaic_0001>

<llo_original>
// kernel: mmf_forward.1
$region0: #{mmf_forward.1}
  #allocation0 [shape = 'u32[]', space=smem, size = 0x4, offset = 0x4, fixed_abs, tag = 'smem constant byte address 0x4 - core index']
  #allocation1 [shape = 'u32[144,128]{1,0:T(1,128)}', space=vmem, size = 0x12000, scoped, tag = 'internal scratch']
  #allocation2 [shape = 'f32[3,10,128]{2,1,0:T(8,128)}', space=vmem, size = 0x6000, scoped, tag = 'scratch operand']
  %s0 = inlined_call_operand.vmem [shape: f32[3,40,128], index: 0, kind: input, shape index: {}, may-alias: {0,1}]
  %s1 = inlined_call_operand.vmem [shape: f32[3,40,128], index: 1, kind: input, shape index: {}, may-alias: {0,1}]
  %s2 = inlined_call_operand.vmem [shape: f32[3,9], index: 2, kind: input, shape index: {}]
  %s3 = inlined_call_operand.vmem [shape: f32[3,9], index: 3, kind: input, shape index: {}]
  %s4 = inlined_call_operand.vmem [shape: f32[2,1], index: 4, kind: input, shape index: {}]
  %s5 = inlined_call_operand.hbm [shape: f32[32,128], index: 5, kind: output, shape index: {0}]
  %s6 = inlined_call_operand.hbm [shape: f32[1,128], index: 6, kind: output, shape index: {1}]
  %7 = xla_tuple %s5, %s6
  %s8 = sld [smem:[#allocation0]]
  $region157: #{mmf_forward.1} parent=0
    _
  %s10 = ssub.s32 1, %s8
  %s11 = scalar_select 0, %s10, %s8
  $region1: #{mmf_forward.1} parent=0
    #allocation3 [shape = 'u8[24576]{0}', space=vmem, size = 0x6000, scoped, tag = 'input window, operand 0']
    #allocation4 [shape = 'u8[24576]{0}', space=vmem, size = 0x6000, scoped, tag = 'input window, operand 1']
    #allocation5 [shape = 'u8[2048]{0}', space=smem, size = 0x800, scoped, tag = 'input window, operand 2, single buffered']
    #allocation6 [shape = 's32[2]{0}', space=sflag, size = 0x8, scoped, tag = 'scoped memory for mmf_forward.1']
    #allocation7 [shape = 's32[2]{0}', space=sflag, size = 0x8, scoped, tag = 'scoped memory for mmf_forward.1']
    #allocation8 [shape = 'u8[2048]{0}', space=smem, size = 0x800, scoped, tag = 'input window, operand 3, single buffered']
    #allocation9 [shape = 's32[1]{0}', space=sflag, size = 0x4, scoped, tag = 'scoped memory for mmf_forward.1']
    #allocation10 [shape = 'u8[1024]{0}', space=smem, size = 0x400, scoped, tag = 'input window, operand 4, single buffered']
    #allocation11 [shape = 'u8[8192]{0}', space=vmem, size = 0x2000, scoped, tag = 'output window, operand 0']
    #allocation12 [shape = 'u8[512]{0}', space=vmem, size = 0x400, scoped, tag = 'output window, operand 1, single buffered']
    #allocation13 [shape = 's32[1]{0}', space=sflag, size = 0x4, scoped, tag = 'scoped memory for mmf_forward.1']
    %12 = vsyncpa [#allocation7], 0
    %13 = vsyncpa [#allocation9], 0
    %14 = vsyncpa [#allocation6], 0
    %s15 = scalar_lea.sflag [#allocation6], 1
    %16 = vsyncpa %s15, 0
    %17 = vsyncpa [#allocation13], 0
    loop: start=0, step=1, limit=6
    $region2: #{mmf_forward.1} parent=1 // loop_pre_header
      _
    $region3: #{mmf_forward.1} parent=1 // loop_header
      %s19 = sphi 0, %s23
      %p20 = scmp.ge.s32.totalorder %s19, 6
      %s29 = sphi 0, %s31
      %s32 = sphi 0, %s29
      %s33 = sphi 0, %s32
      %s49 = sphi 0, %s33
      %s57 = sphi 0, %s59
      %s60 = sphi 0, %s57
      %s61 = sphi 0, %s60
      %s77 = sphi 0, %s61
      %s81 = sphi 0, %s81
      %s83 = sphi 0, %s81
      %s84 = sphi 0, %s83
      %s98 = sphi 0, %s84
      %s102 = sphi 0, %s102
      %s104 = sphi 0, %s102
      %s105 = sphi 0, %s104
      %s119 = sphi 0, %s105
      %s123 = sphi 0, %s123
      %s125 = sphi 0, %s123
      %s126 = sphi 0, %s125
      %s140 = sphi 0, %s126
      %s146 = sphi 0, %s148
      %s149 = sphi 0, %s146
      %s150 = sphi 0, %s149
      %s166 = sphi 0, %s150
      %s170 = sphi 0, %s170
      %s172 = sphi 0, %s170
      %s173 = sphi 0, %s172
      %s187 = sphi 0, %s173
    $region4: #{mmf_forward.1} parent=1 // loop_header_branch
      %22 = sbr.rel (%p20) target = $region8
    $region5: #{mmf_forward.1} parent=1 // loop_body
      %s24 = ssub.s32 %s19, 1
      %s25 = ssub.s32 %s19, 2
      %s26 = sadd.s32 %s19, 1
      %s27 = ssub.s32 %s19, %s26
      %p28 = scmp.eq.s32.totalorder %s27, 0
      %s30 = sadd.s32 %s29, 1
      %s31 = scalar_select %p28, %s29, %s30
      %p34 = pneg %p28
      %p35 = scmp.eq.s32.totalorder %s19, 3
      %p36 = por %p34, %p35
      %p37 = scmp.ne.s32.totalorder %s29, %s32
      %p38 = scmp.eq.s32.totalorder %s19, 0
      %p39 = por %p37, %p38
      %p40 = scmp.ne.s32.totalorder %s29, %s32
      %p41 = scmp.eq.s32.totalorder %s24, 3
      %p42 = por %p40, %p41
      %p43 = scmp.ne.s32.totalorder %s32, %s33
      %p44 = scmp.eq.s32.totalorder %s24, 0
      %p45 = por %p43, %p44
      %p46 = scmp.ne.s32.totalorder %s32, %s33
      %p47 = scmp.eq.s32.totalorder %s25, 3
      %p48 = por %p46, %p47
      %p50 = scmp.ne.s32.totalorder %s33, %s49
      %p51 = scmp.eq.s32.totalorder %s25, 0
      %p52 = por %p50, %p51
      %s53 = sadd.s32 %s19, 1
      %s54 = sadd.s32 %s26, 1
      %s55 = ssub.s32 %s53, %s54
      %p56 = scmp.eq.s32.totalorder %s55, 0
      %s58 = sadd.s32 %s57, 1
      %s59 = scalar_select %p56, %s57, %s58
      %p62 = pneg %p56
      %p63 = scmp.eq.s32.totalorder %s19, 3
      %p64 = por %p62, %p63
      %p65 = scmp.ne.s32.totalorder %s57, %s60
      %p66 = scmp.eq.s32.totalorder %s19, 0
      %p67 = por %p65, %p66
      %p68 = scmp.ne.s32.totalorder %s57, %s60
      %p69 = scmp.eq.s32.totalorder %s24, 3
      %p70 = por %p68, %p69
      %p71 = scmp.ne.s32.totalorder %s60, %s61
      %p72 = scmp.eq.s32.totalorder %s24, 0
      %p73 = por %p71, %p72
      %p74 = scmp.ne.s32.totalorder %s60, %s61
      %p75 = scmp.eq.s32.totalorder %s25, 3
      %p76 = por %p74, %p75
      %p78 = scmp.ne.s32.totalorder %s61, %s77
      %p79 = scmp.eq.s32.totalorder %s25, 0
      %p80 = por %p78, %p79
      %s82 = sadd.s32 %s81, 1
      %p85 = scmp.eq.s32.totalorder %s19, 3
      %p86 = scmp.ne.s32.totalorder %s81, %s83
      %p87 = scmp.eq.s32.totalorder %s19, 0
      %p88 = por %p86, %p87
      %p89 = scmp.ne.s32.totalorder %s81, %s83
      %p90 = scmp.eq.s32.totalorder %s24, 3
      %p91 = por %p89, %p90
      %p92 = scmp.ne.s32.totalorder %s83, %s84
      %p93 = scmp.eq.s32.totalorder %s24, 0
      %p94 = por %p92, %p93
      %p95 = scmp.ne.s32.totalorder %s83, %s84
      %p96 = scmp.eq.s32.totalorder %s25, 3
      %p97 = por %p95, %p96
      %p99 = scmp.ne.s32.totalorder %s84, %s98
      %p100 = scmp.eq.s32.totalorder %s25, 0
      %p101 = por %p99, %p100
      %s103 = sadd.s32 %s102, 1
      %p106 = scmp.eq.s32.totalorder %s19, 3
      %p107 = scmp.ne.s32.totalorder %s102, %s104
      %p108 = scmp.eq.s32.totalorder %s19, 0
      %p109 = por %p107, %p108
      %p110 = scmp.ne.s32.totalorder %s102, %s104
      %p111 = scmp.eq.s32.totalorder %s24, 3
      %p112 = por %p110, %p111
      %p113 = scmp.ne.s32.totalorder %s104, %s105
      %p114 = scmp.eq.s32.totalorder %s24, 0
      %p115 = por %p113, %p114
      %p116 = scmp.ne.s32.totalorder %s104, %s105
      %p117 = scmp.eq.s32.totalorder %s25, 3
      %p118 = por %p116, %p117
      %p120 = scmp.ne.s32.totalorder %s105, %s119
      %p121 = scmp.eq.s32.totalorder %s25, 0
      %p122 = por %p120, %p121
      %s124 = sadd.s32 %s123, 1
      %p127 = scmp.eq.s32.totalorder %s19, 3
      %p128 = scmp.ne.s32.totalorder %s123, %s125
      %p129 = scmp.eq.s32.totalorder %s19, 0
      %p130 = por %p128, %p129
      %p131 = scmp.ne.s32.totalorder %s123, %s125
      %p132 = scmp.eq.s32.totalorder %s24, 3
      %p133 = por %p131, %p132
      %p134 = scmp.ne.s32.totalorder %s125, %s126
      %p135 = scmp.eq.s32.totalorder %s24, 0
      %p136 = por %p134, %p135
      %p137 = scmp.ne.s32.totalorder %s125, %s126
      %p138 = scmp.eq.s32.totalorder %s25, 3
      %p139 = por %p137, %p138
      %p141 = scmp.ne.s32.totalorder %s126, %s140
      %p142 = scmp.eq.s32.totalorder %s25, 0
      %p143 = por %p141, %p142
      %s144 = ssub.s32 %s19, %s26
      %p145 = scmp.eq.s32.totalorder %s144, 0
      %s147 = sadd.s32 %s146, 1
      %s148 = scalar_select %p145, %s146, %s147
      %p151 = pneg %p145
      %p152 = scmp.eq.s32.totalorder %s19, 3
      %p153 = por %p151, %p152
      %p154 = scmp.ne.s32.totalorder %s146, %s149
      %p155 = scmp.eq.s32.totalorder %s19, 0
      %p156 = por %p154, %p155
      %p157 = scmp.ne.s32.totalorder %s146, %s149
      %p158 = scmp.eq.s32.totalorder %s24, 3
      %p159 = por %p157, %p158
      %p160 = scmp.ne.s32.totalorder %s149, %s150
      %p161 = scmp.eq.s32.totalorder %s24, 0
      %p162 = por %p160, %p161
      %p163 = scmp.ne.s32.totalorder %s149, %s150
      %p164 = scmp.eq.s32.totalorder %s25, 3
      %p165 = por %p163, %p164
      %p167 = scmp.ne.s32.totalorder %s150, %s166
      %p168 = scmp.eq.s32.totalorder %s25, 0
      %p169 = por %p167, %p168
      %s171 = sadd.s32 %s170, 1
      %p174 = scmp.eq.s32.totalorder %s19, 3
      %p175 = scmp.ne.s32.totalorder %s170, %s172
      %p176 = scmp.eq.s32.totalorder %s19, 0
      %p177 = por %p175, %p176
      %p178 = scmp.ne.s32.totalorder %s170, %s172
      %p179 = scmp.eq.s32.totalorder %s24, 3
      %p180 = por %p178, %p179
      %p181 = scmp.ne.s32.totalorder %s172, %s173
      %p182 = scmp.eq.s32.totalorder %s24, 0
      %p183 = por %p181, %p182
      %p184 = scmp.ne.s32.totalorder %s172, %s173
      %p185 = scmp.eq.s32.totalorder %s25, 3
      %p186 = por %p184, %p185
      %p188 = scmp.ne.s32.totalorder %s173, %s187
      %p189 = scmp.eq.s32.totalorder %s25, 0
      %p190 = por %p188, %p189
      %p191 = scmp.le.s32.totalorder 1, %s19
      %p192 = scmp.lt.s32.totalorder %s19, 5
      %p193 = pnand %p191, %p192
      %p194 = pneg %p193
      // Predicated region
      $region9: #{mmf_forward.1} parent=5 // pred_check
        _
      $region10: #{mmf_forward.1} parent=5 // pred_check_branch
        %196 = sbr.rel (%p193) target = $region12
      $region11: #{mmf_forward.1} parent=5 // pred_region
        %s197 = ssub.s32 %s19, 1
        // Predicated region
        $region13: #{mmf_forward.1} parent=11 // pred_check
          %p198 = pneg %p94
        $region14: #{mmf_forward.1} parent=11 // pred_check_branch
          %200 = sbr.rel (%p198) target = $region16
        $region15: #{mmf_forward.1} parent=11 // pred_region
          %s202 = ssub.s32 64, 64
          %203 = vsyncadd [#allocation7], %s202
          %s205 = sshll.u32 %s2, 4
          %s206 = int_to_ptr.vmem [resolvable:$true] %s205
          %208 = dma.vmem_to_smem %s206, 64, [#allocation5], [#allocation7]
        $region16: #{mmf_forward.1} parent=11 // pred_fallthru
          _
        // Predicated region
        $region17: #{mmf_forward.1} parent=11 // pred_check
          %p209 = pneg %p115
        $region18: #{mmf_forward.1} parent=11 // pred_check_branch
          %211 = sbr.rel (%p209) target = $region20
        $region19: #{mmf_forward.1} parent=11 // pred_region
          %s213 = ssub.s32 64, 64
          %214 = vsyncadd [#allocation9], %s213
          %s216 = sshll.u32 %s3, 4
          %s217 = int_to_ptr.vmem [resolvable:$true] %s216
          %219 = dma.vmem_to_smem %s217, 64, [#allocation8], [#allocation9]
        $region20: #{mmf_forward.1} parent=11 // pred_fallthru
          _
        // Predicated region
        $region21: #{mmf_forward.1} parent=11 // pred_check
          %p220 = pneg %p136
        $region22: #{mmf_forward.1} parent=11 // pred_check_branch
          %222 = sbr.rel (%p220) target = $region24
        $region23: #{mmf_forward.1} parent=11 // pred_region
          %s224 = ssub.s32 32, 32
          %225 = vsyncadd [#allocation9], %s224
          %s227 = sshll.u32 %s4, 4
          %s228 = int_to_ptr.vmem [resolvable:$true] %s227
          %230 = dma.vmem_to_smem %s228, 32, [#allocation10], [#allocation9]
        $region24: #{mmf_forward.1} parent=11 // pred_fallthru
          _
      $region12: #{mmf_forward.1} parent=5 // pred_fallthru
        _
      %p231 = scmp.lt.s32.totalorder %s19, 4
      // Predicated region
      $region25: #{mmf_forward.1} parent=5 // pred_check
        %p232 = pneg %p231
      $region26: #{mmf_forward.1} parent=5 // pred_check_branch
        %234 = sbr.rel (%p232) target = $region28
      $region27: #{mmf_forward.1} parent=5 // pred_region
        // Predicated region
        $region29: #{mmf_forward.1} parent=27 // pred_check
          %p235 = pneg %p39
        $region30: #{mmf_forward.1} parent=27 // pred_check_branch
          %237 = sbr.rel (%p235) target = $region32
        $region31: #{mmf_forward.1} parent=27 // pred_region
          %s238 = sand.u32 %s29, 1
          %s239 = sand.u32 %s29, 1
          %s240 = smul.addr %s239, 24
          %s241 = scalar_lea.vmem [#allocation3], %s240
          %s242 = smul.addr %s19, 8
          %s243 = scalar_lea.vmem %s0, %s242
          // Predicated region
          $region33: #{mmf_forward.1} parent=31 // pred_check
            _
          $region34: #{mmf_forward.1} parent=31 // pred_check_branch
            %245 = sbr.rel (0) target = $region36
          $region35: #{mmf_forward.1} parent=31 // pred_region
            // Predicated region
            $region37: #{mmf_forward.1} parent=35 // pred_check
              _
            $region38: #{mmf_forward.1} parent=35 // pred_check_branch
              %247 = sbr.rel (0) target = $region40
            $region39: #{mmf_forward.1} parent=35 // pred_region
              // Predicated region
              $region52: #{mmf_forward.1} parent=39 // pred_check
                _
              $region53: #{mmf_forward.1} parent=39 // pred_check_branch
                %267 = sbr.rel (0) target = $region55
              $region54: #{mmf_forward.1} parent=39 // pred_region
                loop: start=0, step=1, limit=1
                $region56: #{mmf_forward.1} parent=54 // loop_pre_header
                  _
                $region57: #{mmf_forward.1} parent=54 // loop_header
                  %s269 = sphi 0, %s273
                  %p270 = scmp.ge.s32.totalorder %s269, 1
                  %s274 = sphi %s243, %s243
                  %s275 = sphi %s241, %s241
                $region58: #{mmf_forward.1} parent=54 // loop_header_branch
                  %272 = sbr.rel (%p270) target = $region62
                $region59: #{mmf_forward.1} parent=54 // loop_body
                  %v276 = vld [vmem:[%s274] sm:$0xff]
                  %277 = vst [vmem:[%s275] sm:$0xff] %v276
                  %v278 = vld [vmem:[%s274 + $0x28] sm:$0xff]
                  %279 = vst [vmem:[%s275 + $0x8] sm:$0xff] %v278
                  %v280 = vld [vmem:[%s274 + $0x50] sm:$0xff]
                  %281 = vst [vmem:[%s275 + $0x10] sm:$0xff] %v280
                $region60: #{mmf_forward.1} parent=54 // loop_footer
                  %s273 = sadd.s32 1, %s269
                $region61: #{mmf_forward.1} parent=54 // loop_footer_branch
                  %268 = sbr.rel target = $region57
                $region62: #{mmf_forward.1} parent=54 // loop_exit
                  _
              $region55: #{mmf_forward.1} parent=39 // pred_fallthru
                _
              // Predicated region
              $region63: #{mmf_forward.1} parent=39 // pred_check
                _
              $region64: #{mmf_forward.1} parent=39 // pred_check_branch
                %283 = sbr.rel target = $region66
              $region65: #{mmf_forward.1} parent=39 // pred_region
                _
              $region66: #{mmf_forward.1} parent=39 // pred_fallthru
                _
            $region40: #{mmf_forward.1} parent=35 // pred_fallthru
              _
            // Predicated region
            $region41: #{mmf_forward.1} parent=35 // pred_check
              _
            $region42: #{mmf_forward.1} parent=35 // pred_check_branch
              %249 = sbr.rel target = $region44
            $region43: #{mmf_forward.1} parent=35 // pred_region
              %s251 = ssub.s32 256, 1
              loop: start=0, step=1, limit=1
              $region45: #{mmf_forward.1} parent=43 // loop_pre_header
                _
              $region46: #{mmf_forward.1} parent=43 // loop_header
                %s253 = sphi 0, %s257
                %p254 = scmp.ge.s32.totalorder %s253, 1
                %s258 = sphi %s243, %s243
                %s259 = sphi %s241, %s241
              $region47: #{mmf_forward.1} parent=43 // loop_header_branch
                %256 = sbr.rel (%p254) target = $region51
              $region48: #{mmf_forward.1} parent=43 // loop_body
                %v260 = vld [vmem:[%s258] sm:%s251]
                %261 = vst [vmem:[%s259] sm:%s251] %v260
                %v262 = vld [vmem:[%s258 + $0x28] sm:%s251]
                %263 = vst [vmem:[%s259 + $0x8] sm:%s251] %v262
                %v264 = vld [vmem:[%s258 + $0x50] sm:%s251]
                %265 = vst [vmem:[%s259 + $0x10] sm:%s251] %v264
              $region49: #{mmf_forward.1} parent=43 // loop_footer
                %s257 = sadd.s32 1, %s253
              $region50: #{mmf_forward.1} parent=43 // loop_footer_branch
                %252 = sbr.rel target = $region46
              $region51: #{mmf_forward.1} parent=43 // loop_exit
                _
            $region44: #{mmf_forward.1} parent=35 // pred_fallthru
              _
          $region36: #{mmf_forward.1} parent=31 // pred_fallthru
            _
          %284 = vnop
        $region32: #{mmf_forward.1} parent=27 // pred_fallthru
          _
        // Predicated region
        $region67: #{mmf_forward.1} parent=27 // pred_check
          %p285 = pneg %p67
        $region68: #{mmf_forward.1} parent=27 // pred_check_branch
          %287 = sbr.rel (%p285) target = $region70
        $region69: #{mmf_forward.1} parent=27 // pred_region
          %s288 = sand.u32 %s57, 1
          %s289 = sand.u32 %s57, 1
          %s290 = smul.addr %s289, 24
          %s291 = scalar_lea.vmem [#allocation4], %s290
          %s292 = sadd.s32 %s19, 1
          %s293 = smul.addr %s292, 8
          %s294 = scalar_lea.vmem %s1, %s293
          // Predicated region
          $region71: #{mmf_forward.1} parent=69 // pred_check
            _
          $region72: #{mmf_forward.1} parent=69 // pred_check_branch
            %296 = sbr.rel (0) target = $region74
          $region73: #{mmf_forward.1} parent=69 // pred_region
            // Predicated region
            $region75: #{mmf_forward.1} parent=73 // pred_check
              _
            $region76: #{mmf_forward.1} parent=73 // pred_check_branch
              %298 = sbr.rel (0) target = $region78
            $region77: #{mmf_forward.1} parent=73 // pred_region
              // Predicated region
              $region90: #{mmf_forward.1} parent=77 // pred_check
                _
              $region91: #{mmf_forward.1} parent=77 // pred_check_branch
                %318 = sbr.rel (0) target = $region93
              $region92: #{mmf_forward.1} parent=77 // pred_region
                loop: start=0, step=1, limit=1
                $region94: #{mmf_forward.1} parent=92 // loop_pre_header
                  _
                $region95: #{mmf_forward.1} parent=92 // loop_header
                  %s320 = sphi 0, %s324
                  %p321 = scmp.ge.s32.totalorder %s320, 1
                  %s325 = sphi %s294, %s294
                  %s326 = sphi %s291, %s291
                $region96: #{mmf_forward.1} parent=92 // loop_header_branch
                  %323 = sbr.rel (%p321) target = $region100
                $region97: #{mmf_forward.1} parent=92 // loop_body
                  %v327 = vld [vmem:[%s325] sm:$0xff]
                  %328 = vst [vmem:[%s326] sm:$0xff] %v327
                  %v329 = vld [vmem:[%s325 + $0x28] sm:$0xff]
                  %330 = vst [vmem:[%s326 + $0x8] sm:$0xff] %v329
                  %v331 = vld [vmem:[%s325 + $0x50] sm:$0xff]
                  %332 = vst [vmem:[%s326 + $0x10] sm:$0xff] %v331
                $region98: #{mmf_forward.1} parent=92 // loop_footer
                  %s324 = sadd.s32 1, %s320
                $region99: #{mmf_forward.1} parent=92 // loop_footer_branch
                  %319 = sbr.rel target = $region95
                $region100: #{mmf_forward.1} parent=92 // loop_exit
                  _
              $region93: #{mmf_forward.1} parent=77 // pred_fallthru
                _
              // Predicated region
              $region101: #{mmf_forward.1} parent=77 // pred_check
                _
              $region102: #{mmf_forward.1} parent=77 // pred_check_branch
                %334 = sbr.rel target = $region104
              $region103: #{mmf_forward.1} parent=77 // pred_region
                _
              $region104: #{mmf_forward.1} parent=77 // pred_fallthru
                _
            $region78: #{mmf_forward.1} parent=73 // pred_fallthru
              _
            // Predicated region
            $region79: #{mmf_forward.1} parent=73 // pred_check
              _
            $region80: #{mmf_forward.1} parent=73 // pred_check_branch
              %300 = sbr.rel target = $region82
            $region81: #{mmf_forward.1} parent=73 // pred_region
              %s302 = ssub.s32 256, 1
              loop: start=0, step=1, limit=1
              $region83: #{mmf_forward.1} parent=81 // loop_pre_header
                _
              $region84: #{mmf_forward.1} parent=81 // loop_header
                %s304 = sphi 0, %s308
                %p305 = scmp.ge.s32.totalorder %s304, 1
                %s309 = sphi %s294, %s294
                %s310 = sphi %s291, %s291
              $region85: #{mmf_forward.1} parent=81 // loop_header_branch
                %307 = sbr.rel (%p305) target = $region89
              $region86: #{mmf_forward.1} parent=81 // loop_body
                %v311 = vld [vmem:[%s309] sm:%s302]
                %312 = vst [vmem:[%s310] sm:%s302] %v311
                %v313 = vld [vmem:[%s309 + $0x28] sm:%s302]
                %314 = vst [vmem:[%s310 + $0x8] sm:%s302] %v313
                %v315 = vld [vmem:[%s309 + $0x50] sm:%s302]
                %316 = vst [vmem:[%s310 + $0x10] sm:%s302] %v315
              $region87: #{mmf_forward.1} parent=81 // loop_footer
                %s308 = sadd.s32 1, %s304
              $region88: #{mmf_forward.1} parent=81 // loop_footer_branch
                %303 = sbr.rel target = $region84
              $region89: #{mmf_forward.1} parent=81 // loop_exit
                _
            $region82: #{mmf_forward.1} parent=73 // pred_fallthru
              _
          $region74: #{mmf_forward.1} parent=69 // pred_fallthru
            _
          %335 = vnop
        $region70: #{mmf_forward.1} parent=27 // pred_fallthru
          _
      $region28: #{mmf_forward.1} parent=5 // pred_fallthru
        _
      %p336 = scmp.le.s32.totalorder 1, %s19
      %p337 = scmp.lt.s32.totalorder %s19, 5
      %p338 = pnand %p336, %p337
      %p339 = pneg %p338
      // Predicated region
      $region105: #{mmf_forward.1} parent=5 // pred_check
        _
      $region106: #{mmf_forward.1} parent=5 // pred_check_branch
        %341 = sbr.rel (%p338) target = $region108
      $region107: #{mmf_forward.1} parent=5 // pred_region
        %s342 = ssub.s32 %s19, 1
        %s343 = sand.u32 %s32, 1
        %s344 = sand.u32 %s32, 1
        %s345 = smul.addr %s344, 24
        %s346 = scalar_lea.vmem [#allocation3], %s345
        // Predicated region
        $region109: #{mmf_forward.1} parent=107 // pred_check
          %p347 = pneg %p45
        $region110: #{mmf_forward.1} parent=107 // pred_check_branch
          %349 = sbr.rel (%p347) target = $region112
        $region111: #{mmf_forward.1} parent=107 // pred_region
          _
        $region112: #{mmf_forward.1} parent=107 // pred_fallthru
          _
        %s350 = sand.u32 %s60, 1
        %s351 = sand.u32 %s60, 1
        %s352 = smul.addr %s351, 24
        %s353 = scalar_lea.vmem [#allocation4], %s352
        // Predicated region
        $region113: #{mmf_forward.1} parent=107 // pred_check
          %p354 = pneg %p73
        $region114: #{mmf_forward.1} parent=107 // pred_check_branch
          %356 = sbr.rel (%p354) target = $region116
        $region115: #{mmf_forward.1} parent=107 // pred_region
          _
        $region116: #{mmf_forward.1} parent=107 // pred_fallthru
          _
        // Predicated region
        $region117: #{mmf_forward.1} parent=107 // pred_check
          %p357 = pneg %p94
        $region118: #{mmf_forward.1} parent=107 // pred_check_branch
          %359 = sbr.rel (%p357) target = $region120
        $region119: #{mmf_forward.1} parent=107 // pred_region
          %360 = dma.done [#allocation7], 64
        $region120: #{mmf_forward.1} parent=107 // pred_fallthru
          _
        // Predicated region
        $region121: #{mmf_forward.1} parent=107 // pred_check
          %p361 = pneg %p115
        $region122: #{mmf_forward.1} parent=107 // pred_check_branch
          %363 = sbr.rel (%p361) target = $region124
        $region123: #{mmf_forward.1} parent=107 // pred_region
          %364 = dma.done [#allocation9], 64
        $region124: #{mmf_forward.1} parent=107 // pred_fallthru
          _
        // Predicated region
        $region125: #{mmf_forward.1} parent=107 // pred_check
          %p365 = pneg %p136
        $region126: #{mmf_forward.1} parent=107 // pred_check_branch
          %367 = sbr.rel (%p365) target = $region128
        $region127: #{mmf_forward.1} parent=107 // pred_region
          %368 = dma.done [#allocation9], 32
        $region128: #{mmf_forward.1} parent=107 // pred_fallthru
          _
        %369 = sfence
        %s370 = sand.u32 %s32, 1
        %s371 = sand.u32 %s32, 1
        %s372 = smul.addr %s371, 24
        %s373 = scalar_lea.vmem [#allocation3], %s372
        %p374 = pneg %p45
        %p375 = pneg %p42
        %s376 = sand.u32 %s60, 1
        %s377 = sand.u32 %s60, 1
        %s378 = smul.addr %s377, 24
        %s379 = scalar_lea.vmem [#allocation4], %s378
        %p380 = pneg %p73
        %p381 = pneg %p70
        %p382 = pneg %p94
        %p383 = pneg %p91
        %p384 = pneg %p115
        %p385 = pneg %p112
        %p386 = pneg %p136
        %p387 = pneg %p133
        %p388 = pneg %p162
        %p389 = pneg %p159
        %s390 = sand.u32 %s149, 1
        %s391 = scalar_lea.sflag [#allocation6], %s390
        %s392 = sand.u32 %s149, 1
        %s393 = smul.addr %s392, 8
        %s394 = scalar_lea.vmem [#allocation11], %s393
        %p395 = pneg %p183
        %p396 = pneg %p180
        %s397 = sadd.s32 %s24, 1
        %v398 = vld [vmem:[%s346] sm:$0xff]
        %v399 = vld [vmem:[%s346 + $0x8] sm:$0xff]
        %v400 = vld [vmem:[%s346 + $0x10] sm:$0xff]
        %401 = vst [vmem:[#allocation2] sm:$0xff] %v398
        %402 = vst [vmem:[#allocation2 + $0x10] sm:$0xff] %v399
        %403 = vst [vmem:[#allocation2 + $0x20] sm:$0xff] %v400
        %v404 = vld [vmem:[%s353] sm:$0x3]
        %v405 = vld [vmem:[%s353 + $0x8] sm:$0x3]
        %v406 = vld [vmem:[%s353 + $0x10] sm:$0x3]
        %407 = vst [vmem:[#allocation2 + $0x8] sm:$0x3] %v404
        %408 = vst [vmem:[#allocation2 + $0x18] sm:$0x3] %v405
        %409 = vst [vmem:[#allocation2 + $0x28] sm:$0x3] %v406
        %v410 = vlaneseq
        %v411 = vand.u32 %v410, 127
        %vm412 = vcmp.ge.s32.totalorder %v411, 1
        %vm413 = vcmp.le.s32.totalorder %v411, 126
        %v414 = vld [vmem:[#allocation2] sm:$0xff]
        %v415 = vld [vmem:[#allocation2 + $0x8] sm:$0x3]
        %416 = vrot.lane.b32.xlu0 %v414, 1
        %v417 = vpop.permute.xlu0 %416
        %418 = vrot.lane.b32.xlu0 %v415, 1
        %v419 = vpop.permute.xlu0 %418
        %v420 = vsel %vm412, %v417, 0.0
        %v421 = vsel %vm412, %v419, 0.0
        %422 = vrot.lane.b32.xlu0 %v414, 127
        %v423 = vpop.permute.xlu0 %422
        %424 = vrot.lane.b32.xlu0 %v415, 127
        %v425 = vpop.permute.xlu0 %424
        %v426 = vsel %vm413, %v423, 0.0
        %v427 = vsel %vm413, %v425, 0.0
        %s428 = sld [smem:[#allocation5]]
        %v429 = vstv %s428
        %v430 = vmul.f32 %v429, %v420
        %v431 = vadd.f32 %v430, 0.0
        %s432 = sld [smem:[#allocation8]]
        %v433 = vstv %s432
        %v434 = vmul.f32 %v433, %v420
        %v435 = vadd.f32 %v434, 0.0
        %s436 = sld [smem:[#allocation5 + $0x1]]
        %v437 = vstv %s436
        %v438 = vmul.f32 %v437, %v414
        %v439 = vadd.f32 %v431, %v438
        %s440 = sld [smem:[#allocation8 + $0x1]]
        %v441 = vstv %s440
        %v442 = vmul.f32 %v441, %v414
        %v443 = vadd.f32 %v435, %v442
        %s444 = sld [smem:[#allocation5 + $0x2]]
        %v445 = vstv %s444
        %v446 = vmul.f32 %v445, %v426
        %v447 = vadd.f32 %v439, %v446
        %s448 = sld [smem:[#allocation8 + $0x2]]
        %v449 = vstv %s448
        %v450 = vmul.f32 %v449, %v426
        %v451 = vadd.f32 %v443, %v450
        %s452 = sld [smem:[#allocation5 + $0x3]]
        %v453 = vstv %s452
        %v454 = vmul.f32 %v453, %v420
        %v455 = vmul.f32 %v453, %v421
        %vm458 = vcmask 1046528
        %v459 = vrot.slane %v454, 1
        %v460 = vrot.slane %v455, 1
        %v461 = vsel %vm458, %v459, %v460
        %v463 = vadd.f32 %v447, %v461
        %s464 = sld [smem:[#allocation8 + $0x3]]
        %v465 = vstv %s464
        %v466 = vmul.f32 %v465, %v420
        %v467 = vmul.f32 %v465, %v421
        %v470 = vrot.slane %v466, 1
        %v471 = vrot.slane %v467, 1
        %v472 = vsel %vm458, %v470, %v471
        %v474 = vadd.f32 %v451, %v472
        %s475 = sld [smem:[#allocation5 + $0x4]]
        %v476 = vstv %s475
        %v477 = vmul.f32 %v476, %v414
        %v478 = vmul.f32 %v476, %v415
        %v481 = vrot.slane %v477, 1
        %v482 = vrot.slane %v478, 1
        %v483 = vsel %vm458, %v481, %v482
        %v485 = vadd.f32 %v463, %v483
        %s486 = sld [smem:[#allocation8 + $0x4]]
        %v487 = vstv %s486
        %v488 = vmul.f32 %v487, %v414
        %v489 = vmul.f32 %v487, %v415
        %v492 = vrot.slane %v488, 1
        %v493 = vrot.slane %v489, 1
        %v494 = vsel %vm458, %v492, %v493
        %v496 = vadd.f32 %v474, %v494
        %s497 = sld [smem:[#allocation5 + $0x5]]
        %v498 = vstv %s497
        %v499 = vmul.f32 %v498, %v426
        %v500 = vmul.f32 %v498, %v427
        %v503 = vrot.slane %v499, 1
        %v504 = vrot.slane %v500, 1
        %v505 = vsel %vm458, %v503, %v504
        %v507 = vadd.f32 %v485, %v505
        %s508 = sld [smem:[#allocation8 + $0x5]]
        %v509 = vstv %s508
        %v510 = vmul.f32 %v509, %v426
        %v511 = vmul.f32 %v509, %v427
        %v514 = vrot.slane %v510, 1
        %v515 = vrot.slane %v511, 1
        %v516 = vsel %vm458, %v514, %v515
        %v518 = vadd.f32 %v496, %v516
        %s519 = sld [smem:[#allocation5 + $0x6]]
        %v520 = vstv %s519
        %v521 = vmul.f32 %v520, %v420
        %v522 = vmul.f32 %v520, %v421
        %vm525 = vcmask 1045504
        %v526 = vrot.slane %v521, 2
        %v527 = vrot.slane %v522, 2
        %v528 = vsel %vm525, %v526, %v527
        %v530 = vadd.f32 %v507, %v528
        %s531 = sld [smem:[#allocation8 + $0x6]]
        %v532 = vstv %s531
        %v533 = vmul.f32 %v532, %v420
        %v534 = vmul.f32 %v532, %v421
        %v537 = vrot.slane %v533, 2
        %v538 = vrot.slane %v534, 2
        %v539 = vsel %vm525, %v537, %v538
        %v541 = vadd.f32 %v518, %v539
        %s542 = sld [smem:[#allocation5 + $0x7]]
        %v543 = vstv %s542
        %v544 = vmul.f32 %v543, %v414
        %v545 = vmul.f32 %v543, %v415
        %v548 = vrot.slane %v544, 2
        %v549 = vrot.slane %v545, 2
        %v550 = vsel %vm525, %v548, %v549
        %v552 = vadd.f32 %v530, %v550
        %s553 = sld [smem:[#allocation8 + $0x7]]
        %v554 = vstv %s553
        %v555 = vmul.f32 %v554, %v414
        %v556 = vmul.f32 %v554, %v415
        %v559 = vrot.slane %v555, 2
        %v560 = vrot.slane %v556, 2
        %v561 = vsel %vm525, %v559, %v560
        %v563 = vadd.f32 %v541, %v561
        %s564 = sld [smem:[#allocation5 + $0x8]]
        %v565 = vstv %s564
        %v566 = vmul.f32 %v565, %v426
        %v567 = vmul.f32 %v565, %v427
        %v570 = vrot.slane %v566, 2
        %v571 = vrot.slane %v567, 2
        %v572 = vsel %vm525, %v570, %v571
        %v574 = vadd.f32 %v552, %v572
        %s575 = sld [smem:[#allocation8 + $0x8]]
        %v576 = vstv %s575
        %v577 = vmul.f32 %v576, %v426
        %v578 = vmul.f32 %v576, %v427
        %v581 = vrot.slane %v577, 2
        %v582 = vrot.slane %v578, 2
        %v583 = vsel %vm525, %v581, %v582
        %v585 = vadd.f32 %v563, %v583
        %s586 = scalar_lea.vmem [#allocation2], 16
        %v587 = vld [vmem:[%s586] sm:$0xff]
        %v588 = vld [vmem:[%s586 + $0x8] sm:$0x3]
        %589 = vrot.lane.b32.xlu0 %v587, 1
        %v590 = vpop.permute.xlu0 %589
        %591 = vrot.lane.b32.xlu0 %v588, 1
        %v592 = vpop.permute.xlu0 %591
        %v593 = vsel %vm412, %v590, 0.0
        %v594 = vsel %vm412, %v592, 0.0
        %595 = vrot.lane.b32.xlu0 %v587, 127
        %v596 = vpop.permute.xlu0 %595
        %597 = vrot.lane.b32.xlu0 %v588, 127
        %v598 = vpop.permute.xlu0 %597
        %v599 = vsel %vm413, %v596, 0.0
        %v600 = vsel %vm413, %v598, 0.0
        %s601 = sld [smem:[#allocation5 + $0x80]]
        %v602 = vstv %s601
        %v603 = vmul.f32 %v602, %v593
        %v604 = vadd.f32 %v574, %v603
        %s605 = sld [smem:[#allocation8 + $0x80]]
        %v606 = vstv %s605
        %v607 = vmul.f32 %v606, %v593
        %v608 = vadd.f32 %v585, %v607
        %s609 = sld [smem:[#allocation5 + $0x81]]
        %v610 = vstv %s609
        %v611 = vmul.f32 %v610, %v587
        %v612 = vadd.f32 %v604, %v611
        %s613 = sld [smem:[#allocation8 + $0x81]]
        %v614 = vstv %s613
        %v615 = vmul.f32 %v614, %v587
        %v616 = vadd.f32 %v608, %v615
        %s617 = sld [smem:[#allocation5 + $0x82]]
        %v618 = vstv %s617
        %v619 = vmul.f32 %v618, %v599
        %v620 = vadd.f32 %v612, %v619
        %s621 = sld [smem:[#allocation8 + $0x82]]
        %v622 = vstv %s621
        %v623 = vmul.f32 %v622, %v599
        %v624 = vadd.f32 %v616, %v623
        %s625 = sld [smem:[#allocation5 + $0x83]]
        %v626 = vstv %s625
        %v627 = vmul.f32 %v626, %v593
        %v628 = vmul.f32 %v626, %v594
        %v631 = vrot.slane %v627, 1
        %v632 = vrot.slane %v628, 1
        %v633 = vsel %vm458, %v631, %v632
        %v635 = vadd.f32 %v620, %v633
        %s636 = sld [smem:[#allocation8 + $0x83]]
        %v637 = vstv %s636
        %v638 = vmul.f32 %v637, %v593
        %v639 = vmul.f32 %v637, %v594
        %v642 = vrot.slane %v638, 1
        %v643 = vrot.slane %v639, 1
        %v644 = vsel %vm458, %v642, %v643
        %v646 = vadd.f32 %v624, %v644
        %s647 = sld [smem:[#allocation5 + $0x84]]
        %v648 = vstv %s647
        %v649 = vmul.f32 %v648, %v587
        %v650 = vmul.f32 %v648, %v588
        %v653 = vrot.slane %v649, 1
        %v654 = vrot.slane %v650, 1
        %v655 = vsel %vm458, %v653, %v654
        %v657 = vadd.f32 %v635, %v655
        %s658 = sld [smem:[#allocation8 + $0x84]]
        %v659 = vstv %s658
        %v660 = vmul.f32 %v659, %v587
        %v661 = vmul.f32 %v659, %v588
        %v664 = vrot.slane %v660, 1
        %v665 = vrot.slane %v661, 1
        %v666 = vsel %vm458, %v664, %v665
        %v668 = vadd.f32 %v646, %v666
        %s669 = sld [smem:[#allocation5 + $0x85]]
        %v670 = vstv %s669
        %v671 = vmul.f32 %v670, %v599
        %v672 = vmul.f32 %v670, %v600
        %v675 = vrot.slane %v671, 1
        %v676 = vrot.slane %v672, 1
        %v677 = vsel %vm458, %v675, %v676
        %v679 = vadd.f32 %v657, %v677
        %s680 = sld [smem:[#allocation8 + $0x85]]
        %v681 = vstv %s680
        %v682 = vmul.f32 %v681, %v599
        %v683 = vmul.f32 %v681, %v600
        %v686 = vrot.slane %v682, 1
        %v687 = vrot.slane %v683, 1
        %v688 = vsel %vm458, %v686, %v687
        %v690 = vadd.f32 %v668, %v688
        %s691 = sld [smem:[#allocation5 + $0x86]]
        %v692 = vstv %s691
        %v693 = vmul.f32 %v692, %v593
        %v694 = vmul.f32 %v692, %v594
        %v697 = vrot.slane %v693, 2
        %v698 = vrot.slane %v694, 2
        %v699 = vsel %vm525, %v697, %v698
        %v701 = vadd.f32 %v679, %v699
        %s702 = sld [smem:[#allocation8 + $0x86]]
        %v703 = vstv %s702
        %v704 = vmul.f32 %v703, %v593
        %v705 = vmul.f32 %v703, %v594
        %v708 = vrot.slane %v704, 2
        %v709 = vrot.slane %v705, 2
        %v710 = vsel %vm525, %v708, %v709
        %v712 = vadd.f32 %v690, %v710
        %s713 = sld [smem:[#allocation5 + $0x87]]
        %v714 = vstv %s713
        %v715 = vmul.f32 %v714, %v587
        %v716 = vmul.f32 %v714, %v588
        %v719 = vrot.slane %v715, 2
        %v720 = vrot.slane %v716, 2
        %v721 = vsel %vm525, %v719, %v720
        %v723 = vadd.f32 %v701, %v721
        %s724 = sld [smem:[#allocation8 + $0x87]]
        %v725 = vstv %s724
        %v726 = vmul.f32 %v725, %v587
        %v727 = vmul.f32 %v725, %v588
        %v730 = vrot.slane %v726, 2
        %v731 = vrot.slane %v727, 2
        %v732 = vsel %vm525, %v730, %v731
        %v734 = vadd.f32 %v712, %v732
        %s735 = sld [smem:[#allocation5 + $0x88]]
        %v736 = vstv %s735
        %v737 = vmul.f32 %v736, %v599
        %v738 = vmul.f32 %v736, %v600
        %v741 = vrot.slane %v737, 2
        %v742 = vrot.slane %v738, 2
        %v743 = vsel %vm525, %v741, %v742
        %v745 = vadd.f32 %v723, %v743
        %s746 = sld [smem:[#allocation8 + $0x88]]
        %v747 = vstv %s746
        %v748 = vmul.f32 %v747, %v599
        %v749 = vmul.f32 %v747, %v600
        %v752 = vrot.slane %v748, 2
        %v753 = vrot.slane %v749, 2
        %v754 = vsel %vm525, %v752, %v753
        %v756 = vadd.f32 %v734, %v754
        %s757 = scalar_lea.vmem [#allocation2], 32
        %v758 = vld [vmem:[%s757] sm:$0xff]
        %v759 = vld [vmem:[%s757 + $0x8] sm:$0x3]
        %760 = vrot.lane.b32.xlu0 %v758, 1
        %v761 = vpop.permute.xlu0 %760
        %762 = vrot.lane.b32.xlu0 %v759, 1
        %v763 = vpop.permute.xlu0 %762
        %v764 = vsel %vm412, %v761, 0.0
        %v765 = vsel %vm412, %v763, 0.0
        %766 = vrot.lane.b32.xlu0 %v758, 127
        %v767 = vpop.permute.xlu0 %766
        %768 = vrot.lane.b32.xlu0 %v759, 127
        %v769 = vpop.permute.xlu0 %768
        %v770 = vsel %vm413, %v767, 0.0
        %v771 = vsel %vm413, %v769, 0.0
        %s772 = sld [smem:[#allocation5 + $0x100]]
        %v773 = vstv %s772
        %v774 = vmul.f32 %v773, %v764
        %v775 = vadd.f32 %v745, %v774
        %s776 = sld [smem:[#allocation8 + $0x100]]
        %v777 = vstv %s776
        %v778 = vmul.f32 %v777, %v764
        %v779 = vadd.f32 %v756, %v778
        %s780 = sld [smem:[#allocation5 + $0x101]]
        %v781 = vstv %s780
        %v782 = vmul.f32 %v781, %v758
        %v783 = vadd.f32 %v775, %v782
        %s784 = sld [smem:[#allocation8 + $0x101]]
        %v785 = vstv %s784
        %v786 = vmul.f32 %v785, %v758
        %v787 = vadd.f32 %v779, %v786
        %s788 = sld [smem:[#allocation5 + $0x102]]
        %v789 = vstv %s788
        %v790 = vmul.f32 %v789, %v770
        %v791 = vadd.f32 %v783, %v790
        %s792 = sld [smem:[#allocation8 + $0x102]]
        %v793 = vstv %s792
        %v794 = vmul.f32 %v793, %v770
        %v795 = vadd.f32 %v787, %v794
        %s796 = sld [smem:[#allocation5 + $0x103]]
        %v797 = vstv %s796
        %v798 = vmul.f32 %v797, %v764
        %v799 = vmul.f32 %v797, %v765
        %v802 = vrot.slane %v798, 1
        %v803 = vrot.slane %v799, 1
        %v804 = vsel %vm458, %v802, %v803
        %v806 = vadd.f32 %v791, %v804
        %s807 = sld [smem:[#allocation8 + $0x103]]
        %v808 = vstv %s807
        %v809 = vmul.f32 %v808, %v764
        %v810 = vmul.f32 %v808, %v765
        %v813 = vrot.slane %v809, 1
        %v814 = vrot.slane %v810, 1
        %v815 = vsel %vm458, %v813, %v814
        %v817 = vadd.f32 %v795, %v815
        %s818 = sld [smem:[#allocation5 + $0x104]]
        %v819 = vstv %s818
        %v820 = vmul.f32 %v819, %v758
        %v821 = vmul.f32 %v819, %v759
        %v824 = vrot.slane %v820, 1
        %v825 = vrot.slane %v821, 1
        %v826 = vsel %vm458, %v824, %v825
        %v828 = vadd.f32 %v806, %v826
        %s829 = sld [smem:[#allocation8 + $0x104]]
        %v830 = vstv %s829
        %v831 = vmul.f32 %v830, %v758
        %v832 = vmul.f32 %v830, %v759
        %v835 = vrot.slane %v831, 1
        %v836 = vrot.slane %v832, 1
        %v837 = vsel %vm458, %v835, %v836
        %v839 = vadd.f32 %v817, %v837
        %s840 = sld [smem:[#allocation5 + $0x105]]
        %v841 = vstv %s840
        %v842 = vmul.f32 %v841, %v770
        %v843 = vmul.f32 %v841, %v771
        %v846 = vrot.slane %v842, 1
        %v847 = vrot.slane %v843, 1
        %v848 = vsel %vm458, %v846, %v847
        %v850 = vadd.f32 %v828, %v848
        %s851 = sld [smem:[#allocation8 + $0x105]]
        %v852 = vstv %s851
        %v853 = vmul.f32 %v852, %v770
        %v854 = vmul.f32 %v852, %v771
        %v857 = vrot.slane %v853, 1
        %v858 = vrot.slane %v854, 1
        %v859 = vsel %vm458, %v857, %v858
        %v861 = vadd.f32 %v839, %v859
        %s862 = sld [smem:[#allocation5 + $0x106]]
        %v863 = vstv %s862
        %v864 = vmul.f32 %v863, %v764
        %v865 = vmul.f32 %v863, %v765
        %v868 = vrot.slane %v864, 2
        %v869 = vrot.slane %v865, 2
        %v870 = vsel %vm525, %v868, %v869
        %v872 = vadd.f32 %v850, %v870
        %s873 = sld [smem:[#allocation8 + $0x106]]
        %v874 = vstv %s873
        %v875 = vmul.f32 %v874, %v764
        %v876 = vmul.f32 %v874, %v765
        %v879 = vrot.slane %v875, 2
        %v880 = vrot.slane %v876, 2
        %v881 = vsel %vm525, %v879, %v880
        %v883 = vadd.f32 %v861, %v881
        %s884 = sld [smem:[#allocation5 + $0x107]]
        %v885 = vstv %s884
        %v886 = vmul.f32 %v885, %v758
        %v887 = vmul.f32 %v885, %v759
        %v890 = vrot.slane %v886, 2
        %v891 = vrot.slane %v887, 2
        %v892 = vsel %vm525, %v890, %v891
        %v894 = vadd.f32 %v872, %v892
        %s895 = sld [smem:[#allocation8 + $0x107]]
        %v896 = vstv %s895
        %v897 = vmul.f32 %v896, %v758
        %v898 = vmul.f32 %v896, %v759
        %v901 = vrot.slane %v897, 2
        %v902 = vrot.slane %v898, 2
        %v903 = vsel %vm525, %v901, %v902
        %v905 = vadd.f32 %v883, %v903
        %s906 = sld [smem:[#allocation5 + $0x108]]
        %v907 = vstv %s906
        %v908 = vmul.f32 %v907, %v770
        %v909 = vmul.f32 %v907, %v771
        %v912 = vrot.slane %v908, 2
        %v913 = vrot.slane %v909, 2
        %v914 = vsel %vm525, %v912, %v913
        %v916 = vadd.f32 %v894, %v914
        %s917 = sld [smem:[#allocation8 + $0x108]]
        %v918 = vstv %s917
        %v919 = vmul.f32 %v918, %v770
        %v920 = vmul.f32 %v918, %v771
        %v923 = vrot.slane %v919, 2
        %v924 = vrot.slane %v920, 2
        %v925 = vsel %vm525, %v923, %v924
        %v927 = vadd.f32 %v905, %v925
        %s928 = sld [smem:[#allocation10]]
        %v929 = vstv %s928
        %v930 = vadd.f32 %v916, %v929
        %v931 = vmul.f32 %v930, 0.5
        %v932 = vtanh.pop %v931
        %v933 = vadd.f32 %v932, 1.0
        %v934 = vmul.f32 %v933, 0.5
        %935 = vst [vmem:[%s394] sm:$0xff] %v934
        %p936 = scmp.eq.s32.totalorder %s24, 0
        // Predicated region
        $region129: #{mmf_forward.1} parent=107 // pred_check
          %p937 = pneg %p936
        $region130: #{mmf_forward.1} parent=107 // pred_check_branch
          %939 = sbr.rel (%p937) target = $region132
        $region131: #{mmf_forward.1} parent=107 // pred_region
          %940 = vst [vmem:[#allocation12] sm:$0x1] 0.0
        $region132: #{mmf_forward.1} parent=107 // pred_fallthru
          _
        %v941 = vld [vmem:[#allocation12] sm:$0x1]
        %v942 = vrot.slane %v927, 4
        %v943 = vadd.f32 %v927, %v942
        %v944 = vrot.slane %v943, 2
        %v945 = vadd.f32 %v943, %v944
        %v946 = vrot.slane %v945, 1
        %v947 = vadd.f32 %v945, %v946
        %v948 = vadd.f32 %v941, %v947
        %949 = vst [vmem:[#allocation12] sm:$0x1] %v948
        %p950 = scmp.eq.s32.totalorder %s24, 3
        // Predicated region
        $region133: #{mmf_forward.1} parent=107 // pred_check
          %p951 = pneg %p950
        $region134: #{mmf_forward.1} parent=107 // pred_check_branch
          %953 = sbr.rel (%p951) target = $region136
        $region135: #{mmf_forward.1} parent=107 // pred_region
          %v954 = vld [vmem:[#allocation12] sm:$0x1]
          %vm955 = vcmask 1040384
          %v956 = vsel %vm955, %v954, 0.0
          %957 = vadd.xlane.f32.xlu0 %v956
          %v958 = vpop.xlane.xlu0 %957
          %v959 = vmul.f32 %v958, 0.00024414063
          %s960 = sld [smem:[#allocation10 + $0x80]]
          %v961 = vstv %s960
          %v962 = vadd.f32 %v959, %v961
          %v963 = vmul.f32 %v962, 0.5
          %v964 = vtanh.pop %v963
          %v965 = vadd.f32 %v964, 1.0
          %v966 = vmul.f32 %v965, 0.5
          %967 = vst [vmem:[#allocation12] sm:$0x1] %v966
        $region136: #{mmf_forward.1} parent=107 // pred_fallthru
          _
        %s968 = sand.u32 %s149, 1
        %s969 = scalar_lea.sflag [#allocation6], %s968
        %s970 = sand.u32 %s149, 1
        %s971 = smul.addr %s970, 8
        %s972 = scalar_lea.vmem [#allocation11], %s971
        // Predicated region
        $region137: #{mmf_forward.1} parent=107 // pred_check
          %p973 = pneg %p159
        $region138: #{mmf_forward.1} parent=107 // pred_check_branch
          %975 = sbr.rel (%p973) target = $region140
        $region139: #{mmf_forward.1} parent=107 // pred_region
          %s977 = ssub.s32 128, 128
          %978 = vsyncadd %s969, %s977
          %s979 = smul.addr %s24, 128
          %s980 = scalar_lea.hbm %s5, %s979
          %s982 = sshll.u32 %s972, 4
          %s983 = int_to_ptr.vmem [resolvable:$true] %s982
          %985 = dma.vmem_to_hbm [thread:$0]  %s983, 128, %s980, %s969
        $region140: #{mmf_forward.1} parent=107 // pred_fallthru
          _
        // Predicated region
        $region141: #{mmf_forward.1} parent=107 // pred_check
          %p986 = pneg %p180
        $region142: #{mmf_forward.1} parent=107 // pred_check_branch
          %988 = sbr.rel (%p986) target = $region144
        $region143: #{mmf_forward.1} parent=107 // pred_region
          %s990 = ssub.s32 16, 16
          %991 = vsyncadd [#allocation13], %s990
          %s993 = sshll.u32 [#allocation12], 4
          %s994 = int_to_ptr.vmem [resolvable:$true] %s993
          %996 = dma.vmem_to_hbm [thread:$0]  %s994, 16, %s6, [#allocation13]
        $region144: #{mmf_forward.1} parent=107 // pred_fallthru
          _
        // Predicated region
        $region145: #{mmf_forward.1} parent=107 // pred_check
          %p997 = pneg %p180
        $region146: #{mmf_forward.1} parent=107 // pred_check_branch
          %999 = sbr.rel (%p997) target = $region148
        $region147: #{mmf_forward.1} parent=107 // pred_region
          %1000 = dma.done [#allocation13], 16
        $region148: #{mmf_forward.1} parent=107 // pred_fallthru
          _
      $region108: #{mmf_forward.1} parent=5 // pred_fallthru
        _
      %p1001 = scmp.le.s32.totalorder 2, %s19
      // Predicated region
      $region149: #{mmf_forward.1} parent=5 // pred_check
        %p1002 = pneg %p1001
      $region150: #{mmf_forward.1} parent=5 // pred_check_branch
        %1004 = sbr.rel (%p1002) target = $region152
      $region151: #{mmf_forward.1} parent=5 // pred_region
        %s1005 = ssub.s32 %s19, 2
        // Predicated region
        $region153: #{mmf_forward.1} parent=151 // pred_check
          %p1006 = pneg %p165
        $region154: #{mmf_forward.1} parent=151 // pred_check_branch
          %1008 = sbr.rel (%p1006) target = $region156
        $region155: #{mmf_forward.1} parent=151 // pred_region
          %s1009 = sand.u32 %s150, 1
          %s1010 = scalar_lea.sflag [#allocation6], %s1009
          %s1011 = sand.u32 %s150, 1
          %s1012 = smul.addr %s1011, 8
          %s1013 = scalar_lea.vmem [#allocation11], %s1012
          %1014 = dma.done %s1010, 128
        $region156: #{mmf_forward.1} parent=151 // pred_fallthru
          _
      $region152: #{mmf_forward.1} parent=5 // pred_fallthru
        _
    $region6: #{mmf_forward.1} parent=1 // loop_footer
      %s23 = sadd.s32 1, %s19
    $region7: #{mmf_forward.1} parent=1 // loop_footer_branch
      %18 = sbr.rel target = $region3
    $region8: #{mmf_forward.1} parent=1 // loop_exit
      _
    %1015 = vsyncpa [#allocation6], 1
    %s1016 = scalar_lea.sflag [#allocation6], 1
    %1017 = vsyncpa %s1016, 1
    %1018 = vsyncpa [#allocation13], 1
    %1019 = vsyncpa [#allocation7], 1
    %s1020 = scalar_lea.sflag [#allocation7], 1
    %1021 = vsyncpa %s1020, 1
    %1022 = vsyncpa [#allocation9], 1

</llo_original>
